<compile_context>
chip_gen: v7x
topology: tpu7x:2x2x1
jax: 0.10.0
libtpu: 0.0.40
codegen_flags: <defaults>
</compile_context>

<pallas_src>
import functools

import jax
import jax.numpy as jnp
from jax import lax
from jax.experimental import pallas as pl
from jax.experimental.pallas import tpu as pltpu

_MiB = 1024 * 1024


# --------------------------------------------------------------------------
# Kernel: one upper-triangle (i, j) tile of
#     new_R = la_R * R + (1 - la_R) * Z^T Z / N
# Grid = (tile_pair p, batch_chunk k); output tile is resident across k.
# --------------------------------------------------------------------------
def _gram_ema_kernel(ti_ref, tj_ref, zi_ref, zj_ref, r_ref, out_ref,
                     *, la_R, inv_n):
    del ti_ref, tj_ref                     # consumed by the index_maps only
    k = pl.program_id(1)

    @pl.when(k == 0)
    def _():
        out_ref[...] = jnp.zeros_like(out_ref)

    # (tN, tD)^T @ (tN, tD): contract over the batch (sublane) axis, f32 acc
    # directly into the resident output tile (no scratch accumulator).
    out_ref[...] += lax.dot_general(
        zi_ref[...], zj_ref[...],
        dimension_numbers=(((0,), (0,)), ((), ())),
        preferred_element_type=jnp.float32)

    @pl.when(k == pl.num_programs(1) - 1)
    def _():
        out_ref[...] = la_R * r_ref[...] + (1.0 - la_R) * inv_n * out_ref[...]


# --------------------------------------------------------------------------
# Tile pickers (lane dim must be a multiple of 128; sublane a multiple of 8)
# --------------------------------------------------------------------------
def _pick_feature_tile(d, cap):
    """Largest tile <= cap dividing d; prefer multiples of 256, then 128."""
    assert d % 128 == 0
    for align in (256, 128):
        t = (min(cap, d) // align) * align
        while t >= align:
            if d % t == 0:
                return t
            t -= align
    return d


def _pick_batch_tile(n, cap):
    """Largest multiple-of-8 tile <= cap dividing n (or n itself if n <= cap)."""
    assert n % 8 == 0
    if n <= cap:
        return n
    for align in (512, 256, 128, 8):
        t = (min(cap, n) // align) * align
        while t >= align:
            if n % t == 0:
                return t
            t -= align
    return n


# --------------------------------------------------------------------------
# Pallas wrapper: z (N, D), R (D, D)  ->  new_R (D, D)  (single view)
# --------------------------------------------------------------------------
def covariance_state_update(z, R, *, la_R, use_bf16=True,
                            td_cap=512, tn_cap=2048,
                            vmem_budget_bytes=40 * _MiB):
    N, D = z.shape
    assert R.shape == (D, D)

    z_dtype = jnp.bfloat16 if use_bf16 else jnp.float32
    zk = z.astype(z_dtype)                 # cast in the wrapper: stream bf16
    Rk = R.astype(jnp.float32)

    # Pad so the lane (feature) dim is a multiple of 128 and the sublane
    # (batch) dim a multiple of 8.  Zero rows/cols contribute nothing to
    # z.T @ z; padded R entries are zero so the padded EMA region stays zero.
    Dp = ((D + 127) // 128) * 128
    Np = ((N + 7) // 8) * 8
    if Dp != D or Np != N:
        zk = jnp.pad(zk, ((0, Np - N), (0, Dp - D)))
    if Dp != D:
        Rk = jnp.pad(Rk, ((0, Dp - D), (0, Dp - D)))

    tD = _pick_feature_tile(Dp, td_cap)
    zb = jnp.dtype(z_dtype).itemsize

    def vmem_estimate(tn):
        # zi + zj double-buffered + R tile + output tile double-buffered.
        return 4 * tn * tD * zb + 16 * tD * tD

    if vmem_estimate(Np) <= vmem_budget_bytes:
        # Whole column block resident: the LHS block index stays constant
        # while j varies, so Pallas does not re-DMA it per tile pair.
        tN = Np
    else:
        tN = _pick_batch_tile(Np, tn_cap)

    nB = Dp // tD
    n_k = Np // tN

    # Upper block-triangle pair list, i-major so the LHS block i is reused
    # across consecutive pairs.
    pairs = [(i, j) for i in range(nB) for j in range(i, nB)]
    ti = jnp.asarray([p[0] for p in pairs], dtype=jnp.int32)
    tj = jnp.asarray([p[1] for p in pairs], dtype=jnp.int32)

    kernel = functools.partial(_gram_ema_kernel,
                               la_R=float(la_R), inv_n=1.0 / float(N))

    grid_spec = pltpu.PrefetchScalarGridSpec(
        num_scalar_prefetch=2,
        grid=(len(pairs), n_k),
        in_specs=[
            # LHS feature-column block i of z
            pl.BlockSpec((tN, tD), lambda p, k, ti_r, tj_r: (k, ti_r[p])),
            # RHS feature-column block j of z
            pl.BlockSpec((tN, tD), lambda p, k, ti_r, tj_r: (k, tj_r[p])),
            # running covariance tile (read once, used on the last k step)
            pl.BlockSpec((tD, tD), lambda p, k, ti_r, tj_r: (ti_r[p], tj_r[p])),
        ],
        out_specs=pl.BlockSpec((tD, tD),
                               lambda p, k, ti_r, tj_r: (ti_r[p], tj_r[p])),
    )

    vmem_limit = int(min(48 * _MiB, max(32 * _MiB, 2 * vmem_estimate(tN))))

    gram_ema = pl.pallas_call(
        kernel,
        out_shape=jax.ShapeDtypeStruct((Dp, Dp), jnp.float32),
        grid_spec=grid_spec,
        compiler_params=pltpu.CompilerParams(
            dimension_semantics=("parallel", "arbitrary"),
            vmem_limit_bytes=vmem_limit),
    )(ti, tj, zk, zk, Rk)

    # Only the upper block-triangle was written; mirror it.  The result is
    # exactly symmetric, which also helps slogdet downstream.
    upper = jnp.triu(gram_ema)
    new_R = upper + jnp.triu(gram_ema, 1).T
    return new_R[:D, :D]


# --------------------------------------------------------------------------
# Full forward (matches CovarianceLossv21.forward; la_mu is unused in v21)
# --------------------------------------------------------------------------
def covariance_loss_v21(z1, z2, R1, R2, *, la_R, R_eps_weight,
                        use_pallas=None, use_bf16=True):
    N, D = z1.shape

    if use_pallas is None:
        # Small problems: a single fused XLA matmul beats the kernel launch +
        # blocked-streaming overhead.  The kernel pays off at realistic
        # projector / batch sizes.
        use_pallas = (D >= 512 and N >= 512)

    if use_pallas:
        new_R1 = covariance_state_update(z1, R1, la_R=la_R, use_bf16=use_bf16)
        new_R2 = covariance_state_update(z2, R2, la_R=la_R, use_bf16=use_bf16)
    else:
        hi = lax.Precision.HIGHEST
        new_R1 = la_R * R1 + (1.0 - la_R) * jnp.matmul(z1.T, z1, precision=hi) / N
        new_R2 = la_R * R2 + (1.0 - la_R) * jnp.matmul(z2.T, z2, precision=hi) / N

    # TODO(synk): PyTorch keeps R in float64 with R_eps_weight=1e-8, which is
    #             below f32 machine epsilon, so the regularizer is effectively
    #             a no-op in f32 (semantics preserved as specified).
    R_eps = R_eps_weight * jnp.eye(D, dtype=jnp.float32)
    # TODO(synk): logdet (matrix factorization) has no clean Pallas TPU
    #             primitive; computed with jnp.linalg.slogdet in plain JAX.
    _, logdet1 = jnp.linalg.slogdet(new_R1 + R_eps)
    _, logdet2 = jnp.linalg.slogdet(new_R2 + R_eps)
    cov_loss = -(logdet1 + logdet2) / D
    return cov_loss, (new_R1, new_R2)


# --------------------------------------------------------------------------
# Pure-JAX references
# --------------------------------------------------------------------------
def _reference(z1, z2, R1, R2, la_R, R_eps_weight):
    N, D = z1.shape
    hi = lax.Precision.HIGHEST
    new_R1 = la_R * R1 + (1.0 - la_R) * jnp.matmul(z1.T, z1, precision=hi) / N
    new_R2 = la_R * R2 + (1.0 - la_R) * jnp.matmul(z2.T, z2, precision=hi) / N
    eps = R_eps_weight * jnp.eye(D, dtype=jnp.float32)
    loss = -(jnp.linalg.slogdet(new_R1 + eps)[1]
             + jnp.linalg.slogdet(new_R2 + eps)[1]) / D
    return loss, (new_R1, new_R2)


def _reference_bf16(z, R, la_R):
    """Reference matched to the bf16-streaming kernel (bf16 inputs, f32 acc)."""
    N = z.shape[0]
    zb = z.astype(jnp.bfloat16)
    gram = jnp.matmul(zb.T, zb, preferred_element_type=jnp.float32) / N
    return la_R * R + (1.0 - la_R) * gram


if __name__ == "__main__":
    # Hyper-params (mirror `args` in the PyTorch module).
    R_ini = 1.0
    la_R = 0.01
    R_eps_weight = 1e-8

    # Small but tile-aligned shapes: batch N=256, projector output dim D=256.
    N, D = 256, 256
    key = jax.random.PRNGKey(0)
    k1, k2 = jax.random.split(key)
    z1 = jax.random.normal(k1, (N, D), dtype=jnp.float32)
    z2 = jax.random.normal(k2, (N, D), dtype=jnp.float32)

    # State init (mirrors __init__): R = R_ini * I.
    R1 = R_ini * jnp.eye(D, dtype=jnp.float32)
    R2 = R_ini * jnp.eye(D, dtype=jnp.float32)

    # --- default path: bf16 streaming Pallas kernel (forced on small shapes
    #     so the kernel is exercised; real use lets the heuristic decide) ----
    loss, (nR1, nR2) = covariance_loss_v21(
        z1, z2, R1, R2, la_R=la_R, R_eps_weight=R_eps_weight,
        use_pallas=True, use_bf16=True)
    jax.block_until_ready((loss, nR1, nR2))

    ref_loss, (rR1, rR2) = _reference(z1, z2, R1, R2, la_R, R_eps_weight)

    # Tight check vs a bf16-matched reference, loose vs the f32 reference.
    bR1 = _reference_bf16(z1, R1, la_R)
    bR2 = _reference_bf16(z2, R2, la_R)
    assert jnp.allclose(nR1, bR1, atol=2e-3, rtol=2e-3), "R1 (bf16) mismatch"
    assert jnp.allclose(nR2, bR2, atol=2e-3, rtol=2e-3), "R2 (bf16) mismatch"
    assert jnp.allclose(nR1, rR1, atol=3e-2, rtol=3e-2), "R1 mismatch"
    assert jnp.allclose(nR2, rR2, atol=3e-2, rtol=3e-2), "R2 mismatch"
    assert jnp.allclose(loss, ref_loss, atol=3e-2, rtol=3e-2), "loss mismatch"

    # --- f32 streaming path: tight check vs the f32 reference --------------
    loss32, (fR1, fR2) = covariance_loss_v21(
        z1, z2, R1, R2, la_R=la_R, R_eps_weight=R_eps_weight,
        use_pallas=True, use_bf16=False)
    jax.block_until_ready((loss32, fR1, fR2))
    assert jnp.allclose(fR1, rR1, atol=1e-3, rtol=1e-3), "R1 (f32) mismatch"
    assert jnp.allclose(fR2, rR2, atol=1e-3, rtol=1e-3), "R2 (f32) mismatch"
    assert jnp.allclose(loss32, ref_loss, atol=1e-3, rtol=1e-3), "loss (f32) mismatch"

    # --- exercise the blocked path (multi tile-pair grid + k reduction) ----
    blk = covariance_state_update(z1, R1, la_R=la_R, use_bf16=True,
                                  td_cap=128, tn_cap=128,
                                  vmem_budget_bytes=512 * 1024)
    jax.block_until_ready(blk)
    assert jnp.allclose(blk, bR1, atol=2e-3, rtol=2e-3), "blocked-path mismatch"

    print("KERNEL_OK")
</pallas_src>

<mosaic_0001>
module attributes {stable_mosaic.version = 11 : i64} {
  func.func @_gram_ema_kernel(%arg0: i32, %arg1: i32, %arg2: memref<1xi32, #tpu.memory_space<smem>>, %arg3: memref<1xi32, #tpu.memory_space<smem>>, %arg4: memref<256x256xbf16, #tpu.memory_space<vmem>>, %arg5: memref<256x256xbf16, #tpu.memory_space<vmem>>, %arg6: memref<256x256xf32, #tpu.memory_space<vmem>>, %arg7: memref<256x256xf32, #tpu.memory_space<vmem>>) attributes {dimension_semantics = [#tpu.dimension_semantics<parallel>, #tpu.dimension_semantics<arbitrary>], iteration_bounds = array<i64: 1, 1>, scalar_prefetch = 2 : i64, scratch_operands = 0 : i64, tpu.core_type = #tpu.core_type<tc>, window_params = [{transform_indices = @transform_0, window_bounds = array<i64: 256, 256>}, {transform_indices = @transform_1, window_bounds = array<i64: 256, 256>}, {transform_indices = @transform_2, window_bounds = array<i64: 256, 256>}, {transform_indices = @transform_3, window_bounds = array<i64: 256, 256>}]} {
    %c0_i32 = arith.constant 0 : i32
    %0 = arith.cmpi eq, %arg1, %c0_i32 : i32
    %1 = arith.extui %0 : i1 to i32
    %c0_i32_0 = arith.constant 0 : i32
    %2 = arith.cmpi ne, %1, %c0_i32_0 : i32
    scf.if %2 {
      %cst_10 = arith.constant 0.000000e+00 : f32
      %12 = vector.broadcast %cst_10 : f32 to vector<256x256xf32>
      %c0_11 = arith.constant 0 : index
      %c0_12 = arith.constant 0 : index
      %13 = vector.load %arg7[%c0_11, %c0_12] : memref<256x256xf32, #tpu.memory_space<vmem>>, vector<256x256xf32>
      tpu.vector_store %arg7[%c0_11, %c0_12], %12 {strides = array<i32>} : memref<256x256xf32, #tpu.memory_space<vmem>>, vector<256x256xf32>,
    } else {
    }
    %c0 = arith.constant 0 : index
    %c0_1 = arith.constant 0 : index
    %3 = vector.load %arg7[%c0, %c0_1] : memref<256x256xf32, #tpu.memory_space<vmem>>, vector<256x256xf32>
    %c0_2 = arith.constant 0 : index
    %c0_3 = arith.constant 0 : index
    %4 = vector.load %arg4[%c0_2, %c0_3] : memref<256x256xbf16, #tpu.memory_space<vmem>>, vector<256x256xbf16>
    %c0_4 = arith.constant 0 : index
    %c0_5 = arith.constant 0 : index
    %5 = vector.load %arg5[%c0_4, %c0_5] : memref<256x256xbf16, #tpu.memory_space<vmem>>, vector<256x256xbf16>
    %cst = arith.constant dense<0.000000e+00> : vector<256x256xf32>
    %6 = tpu.matmul %4, %5, %cst {dimension_numbers = #tpu.dot_dimension_numbers<[0], [0], [1], [1], [0, 1, 1, 1], [], []>} : vector<256x256xbf16>, vector<256x256xbf16>, vector<256x256xf32> -> vector<256x256xf32>
    %7 = arith.addf %3, %6 : vector<256x256xf32>
    %c0_6 = arith.constant 0 : index
    %c0_7 = arith.constant 0 : index
    %8 = vector.load %arg7[%c0_6, %c0_7] : memref<256x256xf32, #tpu.memory_space<vmem>>, vector<256x256xf32>
    tpu.vector_store %arg7[%c0_6, %c0_7], %7 {strides = array<i32>} : memref<256x256xf32, #tpu.memory_space<vmem>>, vector<256x256xf32>,
    %c0_i32_8 = arith.constant 0 : i32
    %9 = arith.cmpi eq, %arg1, %c0_i32_8 : i32
    %10 = arith.extui %9 : i1 to i32
    %c0_i32_9 = arith.constant 0 : i32
    %11 = arith.cmpi ne, %10, %c0_i32_9 : i32
    scf.if %11 {
      %c0_10 = arith.constant 0 : index
      %c0_11 = arith.constant 0 : index
      %12 = vector.load %arg6[%c0_10, %c0_11] : memref<256x256xf32, #tpu.memory_space<vmem>>, vector<256x256xf32>
      %cst_12 = arith.constant 0.00999999977 : f32
      %13 = vector.broadcast %cst_12 : f32 to vector<256x256xf32>
      %14 = arith.mulf %13, %12 : vector<256x256xf32>
      %c0_13 = arith.constant 0 : index
      %c0_14 = arith.constant 0 : index
      %15 = vector.load %arg7[%c0_13, %c0_14] : memref<256x256xf32, #tpu.memory_space<vmem>>, vector<256x256xf32>
      %cst_15 = arith.constant 0.00386718754 : f32
      %16 = vector.broadcast %cst_15 : f32 to vector<256x256xf32>
      %17 = arith.mulf %16, %15 : vector<256x256xf32>
      %18 = arith.addf %14, %17 : vector<256x256xf32>
      %c0_16 = arith.constant 0 : index
      %c0_17 = arith.constant 0 : index
      %19 = vector.load %arg7[%c0_16, %c0_17] : memref<256x256xf32, #tpu.memory_space<vmem>>, vector<256x256xf32>
      tpu.vector_store %arg7[%c0_16, %c0_17], %18 {strides = array<i32>} : memref<256x256xf32, #tpu.memory_space<vmem>>, vector<256x256xf32>,
    } else {
    }
    return
  }
  func.func @transform_0(%arg0: i32, %arg1: i32, %arg2: memref<1xi32, #tpu.memory_space<smem>>, %arg3: memref<1xi32, #tpu.memory_space<smem>>) -> (i32, i32) {
    %0 = arith.index_cast %arg0 : i32 to index
    %1 = memref.load %arg2[%0] : memref<1xi32, #tpu.memory_space<smem>>
    %c0_i32 = arith.constant 0 : i32
    return %arg1, %1 : i32, i32
  }
  func.func @transform_1(%arg0: i32, %arg1: i32, %arg2: memref<1xi32, #tpu.memory_space<smem>>, %arg3: memref<1xi32, #tpu.memory_space<smem>>) -> (i32, i32) {
    %0 = arith.index_cast %arg0 : i32 to index
    %1 = memref.load %arg3[%0] : memref<1xi32, #tpu.memory_space<smem>>
    %c0_i32 = arith.constant 0 : i32
    return %arg1, %1 : i32, i32
  }
  func.func @transform_2(%arg0: i32, %arg1: i32, %arg2: memref<1xi32, #tpu.memory_space<smem>>, %arg3: memref<1xi32, #tpu.memory_space<smem>>) -> (i32, i32) {
    %0 = arith.index_cast %arg0 : i32 to index
    %1 = memref.load %arg2[%0] : memref<1xi32, #tpu.memory_space<smem>>
    %2 = arith.index_cast %arg0 : i32 to index
    %3 = memref.load %arg3[%2] : memref<1xi32, #tpu.memory_space<smem>>
    %c0_i32 = arith.constant 0 : i32
    return %1, %3 : i32, i32
  }
  func.func @transform_3(%arg0: i32, %arg1: i32, %arg2: memref<1xi32, #tpu.memory_space<smem>>, %arg3: memref<1xi32, #tpu.memory_space<smem>>) -> (i32, i32) {
    %0 = arith.index_cast %arg0 : i32 to index
    %1 = memref.load %arg2[%0] : memref<1xi32, #tpu.memory_space<smem>>
    %2 = arith.index_cast %arg0 : i32 to index
    %3 = memref.load %arg3[%2] : memref<1xi32, #tpu.memory_space<smem>>
    %c0_i32 = arith.constant 0 : i32
    return %1, %3 : i32, i32
  }
}

</mosaic_0001>

<llo_original>
// kernel: tpu_custom_call.1
$region0: #{tpu_custom_call.1}
  #allocation0 [shape = 'u32[]', space=smem, size = 0x4, offset = 0x4, fixed_abs, tag = 'smem constant byte address 0x4 - core index']
  #allocation1 [shape = 'u32[144,128]{1,0:T(1,128)}', space=vmem, size = 0x12000, scoped, tag = 'internal scratch']
  #allocation2 [shape = 's32[1]{0}', space=sflag, size = 0x4, scoped, tag = 'scoped memory for tpu_custom_call.1']
  #allocation3 [shape = 's32[1]{0:T(128)S(6)}', space=smem, size = 0x200, scoped, tag = 'prefetched SMEM operand 0']
  #allocation4 [shape = 's32[1]{0:T(128)S(6)}', space=smem, size = 0x200, scoped, tag = 'prefetched SMEM operand 1']
  %s0 = inlined_call_operand.<no memory space> [shape: s32[1], index: 0, kind: input, shape index: {}]
  %s1 = inlined_call_operand.<no memory space> [shape: s32[1], index: 1, kind: input, shape index: {}]
  %s2 = inlined_call_operand.hbm [shape: bf16[256,256], index: 2, kind: input, shape index: {}]
  %s3 = inlined_call_operand.hbm [shape: bf16[256,256], index: 3, kind: input, shape index: {}]
  %s4 = inlined_call_operand.hbm [shape: f32[256,256], index: 4, kind: input, shape index: {}]
  %s5 = inlined_call_operand.hbm [shape: f32[256,256], index: 5, kind: output, shape index: {}]
  %s6 = sld [smem:[#allocation0]]
  $region42: #{tpu_custom_call.1} parent=0
    _
  %s8 = ssub.s32 1, %s6
  %s9 = scalar_select 0, %s8, %s6
  %10 = sst [smem:[#allocation3]] %s0
  %11 = sst [smem:[#allocation4]] %s1
  $region1: #{tpu_custom_call.1} parent=0
    #allocation5 [shape = 'u8[131072]{0}', space=vmem, size = 0x20000, scoped, tag = 'input window, operand 2, single buffered']
    #allocation6 [shape = 's32[1]{0}', space=sflag, size = 0x4, scoped, tag = 'scoped memory for tpu_custom_call.1']
    #allocation7 [shape = 's32[1]{0}', space=sflag, size = 0x4, scoped, tag = 'scoped memory for tpu_custom_call.1']
    #allocation8 [shape = 'u8[131072]{0}', space=vmem, size = 0x20000, scoped, tag = 'input window, operand 3, single buffered']
    #allocation9 [shape = 's32[1]{0}', space=sflag, size = 0x4, scoped, tag = 'scoped memory for tpu_custom_call.1']
    #allocation10 [shape = 'u8[262144]{0}', space=vmem, size = 0x40000, scoped, tag = 'input window, operand 4, single buffered']
    #allocation11 [shape = 'u8[262144]{0}', space=vmem, size = 0x40000, scoped, tag = 'output window, operand 0, single buffered']
    %12 = vsyncpa [#allocation6], 0
    %13 = vsyncpa [#allocation9], 0
    %14 = vsyncpa [#allocation7], 0
    // Predicated region
    $region2: #{tpu_custom_call.1} parent=1 // pred_check
      _
    $region3: #{tpu_custom_call.1} parent=1 // pred_check_branch
      %16 = sbr.rel (0) target = $region5
    $region4: #{tpu_custom_call.1} parent=1 // pred_region
      %s17 = sld [smem:[#allocation3]]
      %s18 = smul.u32 2, %s17
      %s20 = ssub.s32 4096, 4096
      %21 = vsyncadd [#allocation6], %s20
      %s22 = smul.addr %s18, 64
      %s23 = scalar_lea.hbm %s2, %s22
      %s24 = sshll.u32 [#allocation5], 4
      %s25 = int_to_ptr.vmem [resolvable:$true] %s24
      %30 = dma.hbm_to_vmem [thread:$0]  %s23, 4096, %s25, [#allocation6], 128, 128, 8
    $region5: #{tpu_custom_call.1} parent=1 // pred_fallthru
      _
    // Predicated region
    $region6: #{tpu_custom_call.1} parent=1 // pred_check
      _
    $region7: #{tpu_custom_call.1} parent=1 // pred_check_branch
      %32 = sbr.rel (0) target = $region9
    $region8: #{tpu_custom_call.1} parent=1 // pred_region
      %s33 = sld [smem:[#allocation4]]
      %s34 = smul.u32 2, %s33
      %s36 = ssub.s32 4096, 4096
      %37 = vsyncadd [#allocation9], %s36
      %s38 = smul.addr %s34, 64
      %s39 = scalar_lea.hbm %s3, %s38
      %s40 = sshll.u32 [#allocation8], 4
      %s41 = int_to_ptr.vmem [resolvable:$true] %s40
      %46 = dma.hbm_to_vmem [thread:$0]  %s39, 4096, %s41, [#allocation9], 128, 128, 8
    $region9: #{tpu_custom_call.1} parent=1 // pred_fallthru
      _
    // Predicated region
    $region10: #{tpu_custom_call.1} parent=1 // pred_check
      _
    $region11: #{tpu_custom_call.1} parent=1 // pred_check_branch
      %48 = sbr.rel (0) target = $region13
    $region12: #{tpu_custom_call.1} parent=1 // pred_region
      %s49 = sld [smem:[#allocation3]]
      %s50 = sld [smem:[#allocation4]]
      %s51 = smul.u32 32, %s49
      %s52 = smul.u32 2, %s50
      %s54 = ssub.s32 8192, 8192
      %55 = vsyncadd [#allocation9], %s54
      %s56 = smul.addr %s51, 2
      %s57 = sadd.s32 %s52, %s56
      %s58 = smul.addr %s57, 128
      %s59 = scalar_lea.hbm %s4, %s58
      %s60 = sshll.u32 [#allocation10], 4
      %s61 = int_to_ptr.vmem [resolvable:$true] %s60
      %66 = dma.hbm_to_vmem [thread:$0]  %s59, 8192, %s61, [#allocation9], 256, 256, 16
    $region13: #{tpu_custom_call.1} parent=1 // pred_fallthru
      _
    // Predicated region
    $region14: #{tpu_custom_call.1} parent=1 // pred_check
      _
    $region15: #{tpu_custom_call.1} parent=1 // pred_check_branch
      %68 = sbr.rel (0) target = $region17
    $region16: #{tpu_custom_call.1} parent=1 // pred_region
      %69 = dma.done [#allocation6], 4096
    $region17: #{tpu_custom_call.1} parent=1 // pred_fallthru
      _
    // Predicated region
    $region18: #{tpu_custom_call.1} parent=1 // pred_check
      _
    $region19: #{tpu_custom_call.1} parent=1 // pred_check_branch
      %71 = sbr.rel (0) target = $region21
    $region20: #{tpu_custom_call.1} parent=1 // pred_region
      %72 = dma.done [#allocation9], 4096
    $region21: #{tpu_custom_call.1} parent=1 // pred_fallthru
      _
    // Predicated region
    $region22: #{tpu_custom_call.1} parent=1 // pred_check
      _
    $region23: #{tpu_custom_call.1} parent=1 // pred_check_branch
      %74 = sbr.rel (0) target = $region25
    $region24: #{tpu_custom_call.1} parent=1 // pred_region
      %75 = dma.done [#allocation9], 8192
    $region25: #{tpu_custom_call.1} parent=1 // pred_fallthru
      _
    %s76 = sld [smem:[#allocation3]]
    %s77 = smul.u32 2, %s76
    %s78 = sld [smem:[#allocation4]]
    %s79 = smul.u32 2, %s78
    %s80 = sld [smem:[#allocation3]]
    %s81 = sld [smem:[#allocation4]]
    %s82 = smul.u32 32, %s80
    %s83 = smul.u32 2, %s81
    %s84 = sld [smem:[#allocation3]]
    %s85 = sld [smem:[#allocation4]]
    %s86 = smul.u32 32, %s84
    %s87 = smul.u32 2, %s85
    %p88 = scmp.eq.s32.totalorder 0, 0
    // Predicated region
    $region26: #{tpu_custom_call.1} parent=1 // pred_check
      %p89 = pneg %p88
    $region27: #{tpu_custom_call.1} parent=1 // pred_check_branch
      %91 = sbr.rel (%p89) target = $region29
    $region28: #{tpu_custom_call.1} parent=1 // pred_region
      %92 = vst [vmem:[#allocation11] sm:$0xff] 0.0
      %93 = vst [vmem:[#allocation11 + $0x8] sm:$0xff] 0.0
      %94 = vst [vmem:[#allocation11 + $0x10] sm:$0xff] 0.0
      %95 = vst [vmem:[#allocation11 + $0x18] sm:$0xff] 0.0
      %96 = vst [vmem:[#allocation11 + $0x20] sm:$0xff] 0.0
      %97 = vst [vmem:[#allocation11 + $0x28] sm:$0xff] 0.0
      %98 = vst [vmem:[#allocation11 + $0x30] sm:$0xff] 0.0
      %99 = vst [vmem:[#allocation11 + $0x38] sm:$0xff] 0.0
      %100 = vst [vmem:[#allocation11 + $0x40] sm:$0xff] 0.0
      %101 = vst [vmem:[#allocation11 + $0x48] sm:$0xff] 0.0
      %102 = vst [vmem:[#allocation11 + $0x50] sm:$0xff] 0.0
      %103 = vst [vmem:[#allocation11 + $0x58] sm:$0xff] 0.0
      %104 = vst [vmem:[#allocation11 + $0x60] sm:$0xff] 0.0
      %105 = vst [vmem:[#allocation11 + $0x68] sm:$0xff] 0.0
      %106 = vst [vmem:[#allocation11 + $0x70] sm:$0xff] 0.0
      %107 = vst [vmem:[#allocation11 + $0x78] sm:$0xff] 0.0
      %108 = vst [vmem:[#allocation11 + $0x80] sm:$0xff] 0.0
      %109 = vst [vmem:[#allocation11 + $0x88] sm:$0xff] 0.0
      %110 = vst [vmem:[#allocation11 + $0x90] sm:$0xff] 0.0
      %111 = vst [vmem:[#allocation11 + $0x98] sm:$0xff] 0.0
      %112 = vst [vmem:[#allocation11 + $0xa0] sm:$0xff] 0.0
      %113 = vst [vmem:[#allocation11 + $0xa8] sm:$0xff] 0.0
      %114 = vst [vmem:[#allocation11 + $0xb0] sm:$0xff] 0.0
      %115 = vst [vmem:[#allocation11 + $0xb8] sm:$0xff] 0.0
      %116 = vst [vmem:[#allocation11 + $0xc0] sm:$0xff] 0.0
      %117 = vst [vmem:[#allocation11 + $0xc8] sm:$0xff] 0.0
      %118 = vst [vmem:[#allocation11 + $0xd0] sm:$0xff] 0.0
      %119 = vst [vmem:[#allocation11 + $0xd8] sm:$0xff] 0.0
      %120 = vst [vmem:[#allocation11 + $0xe0] sm:$0xff] 0.0
      %121 = vst [vmem:[#allocation11 + $0xe8] sm:$0xff] 0.0
      %122 = vst [vmem:[#allocation11 + $0xf0] sm:$0xff] 0.0
      %123 = vst [vmem:[#allocation11 + $0xf8] sm:$0xff] 0.0
      %124 = vst [vmem:[#allocation11 + $0x100] sm:$0xff] 0.0
      %125 = vst [vmem:[#allocation11 + $0x108] sm:$0xff] 0.0
      %126 = vst [vmem:[#allocation11 + $0x110] sm:$0xff] 0.0
      %127 = vst [vmem:[#allocation11 + $0x118] sm:$0xff] 0.0
      %128 = vst [vmem:[#allocation11 + $0x120] sm:$0xff] 0.0
      %129 = vst [vmem:[#allocation11 + $0x128] sm:$0xff] 0.0
      %130 = vst [vmem:[#allocation11 + $0x130] sm:$0xff] 0.0
      %131 = vst [vmem:[#allocation11 + $0x138] sm:$0xff] 0.0
      %132 = vst [vmem:[#allocation11 + $0x140] sm:$0xff] 0.0
      %133 = vst [vmem:[#allocation11 + $0x148] sm:$0xff] 0.0
      %134 = vst [vmem:[#allocation11 + $0x150] sm:$0xff] 0.0
      %135 = vst [vmem:[#allocation11 + $0x158] sm:$0xff] 0.0
      %136 = vst [vmem:[#allocation11 + $0x160] sm:$0xff] 0.0
      %137 = vst [vmem:[#allocation11 + $0x168] sm:$0xff] 0.0
      %138 = vst [vmem:[#allocation11 + $0x170] sm:$0xff] 0.0
      %139 = vst [vmem:[#allocation11 + $0x178] sm:$0xff] 0.0
      %140 = vst [vmem:[#allocation11 + $0x180] sm:$0xff] 0.0
      %141 = vst [vmem:[#allocation11 + $0x188] sm:$0xff] 0.0
      %142 = vst [vmem:[#allocation11 + $0x190] sm:$0xff] 0.0
      %143 = vst [vmem:[#allocation11 + $0x198] sm:$0xff] 0.0
      %144 = vst [vmem:[#allocation11 + $0x1a0] sm:$0xff] 0.0
      %145 = vst [vmem:[#allocation11 + $0x1a8] sm:$0xff] 0.0
      %146 = vst [vmem:[#allocation11 + $0x1b0] sm:$0xff] 0.0
      %147 = vst [vmem:[#allocation11 + $0x1b8] sm:$0xff] 0.0
      %148 = vst [vmem:[#allocation11 + $0x1c0] sm:$0xff] 0.0
      %149 = vst [vmem:[#allocation11 + $0x1c8] sm:$0xff] 0.0
      %150 = vst [vmem:[#allocation11 + $0x1d0] sm:$0xff] 0.0
      %151 = vst [vmem:[#allocation11 + $0x1d8] sm:$0xff] 0.0
      %152 = vst [vmem:[#allocation11 + $0x1e0] sm:$0xff] 0.0
      %153 = vst [vmem:[#allocation11 + $0x1e8] sm:$0xff] 0.0
      %154 = vst [vmem:[#allocation11 + $0x1f0] sm:$0xff] 0.0
      %155 = vst [vmem:[#allocation11 + $0x1f8] sm:$0xff] 0.0
    $region29: #{tpu_custom_call.1} parent=1 // pred_fallthru
      _
    %v156 = vld [vmem:[#allocation11] sm:$0xff]
    %v157 = vld [vmem:[#allocation11 + $0x8] sm:$0xff]
    %v158 = vld [vmem:[#allocation11 + $0x10] sm:$0xff]
    %v159 = vld [vmem:[#allocation11 + $0x18] sm:$0xff]
    %v160 = vld [vmem:[#allocation11 + $0x20] sm:$0xff]
    %v161 = vld [vmem:[#allocation11 + $0x28] sm:$0xff]
    %v162 = vld [vmem:[#allocation11 + $0x30] sm:$0xff]
    %v163 = vld [vmem:[#allocation11 + $0x38] sm:$0xff]
    %v164 = vld [vmem:[#allocation11 + $0x40] sm:$0xff]
    %v165 = vld [vmem:[#allocation11 + $0x48] sm:$0xff]
    %v166 = vld [vmem:[#allocation11 + $0x50] sm:$0xff]
    %v167 = vld [vmem:[#allocation11 + $0x58] sm:$0xff]
    %v168 = vld [vmem:[#allocation11 + $0x60] sm:$0xff]
    %v169 = vld [vmem:[#allocation11 + $0x68] sm:$0xff]
    %v170 = vld [vmem:[#allocation11 + $0x70] sm:$0xff]
    %v171 = vld [vmem:[#allocation11 + $0x78] sm:$0xff]
    %v172 = vld [vmem:[#allocation11 + $0x80] sm:$0xff]
    %v173 = vld [vmem:[#allocation11 + $0x88] sm:$0xff]
    %v174 = vld [vmem:[#allocation11 + $0x90] sm:$0xff]
    %v175 = vld [vmem:[#allocation11 + $0x98] sm:$0xff]
    %v176 = vld [vmem:[#allocation11 + $0xa0] sm:$0xff]
    %v177 = vld [vmem:[#allocation11 + $0xa8] sm:$0xff]
    %v178 = vld [vmem:[#allocation11 + $0xb0] sm:$0xff]
    %v179 = vld [vmem:[#allocation11 + $0xb8] sm:$0xff]
    %v180 = vld [vmem:[#allocation11 + $0xc0] sm:$0xff]
    %v181 = vld [vmem:[#allocation11 + $0xc8] sm:$0xff]
    %v182 = vld [vmem:[#allocation11 + $0xd0] sm:$0xff]
    %v183 = vld [vmem:[#allocation11 + $0xd8] sm:$0xff]
    %v184 = vld [vmem:[#allocation11 + $0xe0] sm:$0xff]
    %v185 = vld [vmem:[#allocation11 + $0xe8] sm:$0xff]
    %v186 = vld [vmem:[#allocation11 + $0xf0] sm:$0xff]
    %v187 = vld [vmem:[#allocation11 + $0xf8] sm:$0xff]
    %v188 = vld [vmem:[#allocation11 + $0x100] sm:$0xff]
    %v189 = vld [vmem:[#allocation11 + $0x108] sm:$0xff]
    %v190 = vld [vmem:[#allocation11 + $0x110] sm:$0xff]
    %v191 = vld [vmem:[#allocation11 + $0x118] sm:$0xff]
    %v192 = vld [vmem:[#allocation11 + $0x120] sm:$0xff]
    %v193 = vld [vmem:[#allocation11 + $0x128] sm:$0xff]
    %v194 = vld [vmem:[#allocation11 + $0x130] sm:$0xff]
    %v195 = vld [vmem:[#allocation11 + $0x138] sm:$0xff]
    %v196 = vld [vmem:[#allocation11 + $0x140] sm:$0xff]
    %v197 = vld [vmem:[#allocation11 + $0x148] sm:$0xff]
    %v198 = vld [vmem:[#allocation11 + $0x150] sm:$0xff]
    %v199 = vld [vmem:[#allocation11 + $0x158] sm:$0xff]
    %v200 = vld [vmem:[#allocation11 + $0x160] sm:$0xff]
    %v201 = vld [vmem:[#allocation11 + $0x168] sm:$0xff]
    %v202 = vld [vmem:[#allocation11 + $0x170] sm:$0xff]
    %v203 = vld [vmem:[#allocation11 + $0x178] sm:$0xff]
    %v204 = vld [vmem:[#allocation11 + $0x180] sm:$0xff]
    %v205 = vld [vmem:[#allocation11 + $0x188] sm:$0xff]
    %v206 = vld [vmem:[#allocation11 + $0x190] sm:$0xff]
    %v207 = vld [vmem:[#allocation11 + $0x198] sm:$0xff]
    %v208 = vld [vmem:[#allocation11 + $0x1a0] sm:$0xff]
    %v209 = vld [vmem:[#allocation11 + $0x1a8] sm:$0xff]
    %v210 = vld [vmem:[#allocation11 + $0x1b0] sm:$0xff]
    %v211 = vld [vmem:[#allocation11 + $0x1b8] sm:$0xff]
    %v212 = vld [vmem:[#allocation11 + $0x1c0] sm:$0xff]
    %v213 = vld [vmem:[#allocation11 + $0x1c8] sm:$0xff]
    %v214 = vld [vmem:[#allocation11 + $0x1d0] sm:$0xff]
    %v215 = vld [vmem:[#allocation11 + $0x1d8] sm:$0xff]
    %v216 = vld [vmem:[#allocation11 + $0x1e0] sm:$0xff]
    %v217 = vld [vmem:[#allocation11 + $0x1e8] sm:$0xff]
    %v218 = vld [vmem:[#allocation11 + $0x1f0] sm:$0xff]
    %v219 = vld [vmem:[#allocation11 + $0x1f8] sm:$0xff]
    %v220 = vld [vmem:[#allocation5] sm:$0xff]
    %v221 = vld [vmem:[#allocation5 + $0x8] sm:$0xff]
    %v222 = vld [vmem:[#allocation5 + $0x10] sm:$0xff]
    %v223 = vld [vmem:[#allocation5 + $0x18] sm:$0xff]
    %v224 = vld [vmem:[#allocation5 + $0x20] sm:$0xff]
    %v225 = vld [vmem:[#allocation5 + $0x28] sm:$0xff]
    %v226 = vld [vmem:[#allocation5 + $0x30] sm:$0xff]
    %v227 = vld [vmem:[#allocation5 + $0x38] sm:$0xff]
    %v228 = vld [vmem:[#allocation5 + $0x40] sm:$0xff]
    %v229 = vld [vmem:[#allocation5 + $0x48] sm:$0xff]
    %v230 = vld [vmem:[#allocation5 + $0x50] sm:$0xff]
    %v231 = vld [vmem:[#allocation5 + $0x58] sm:$0xff]
    %v232 = vld [vmem:[#allocation5 + $0x60] sm:$0xff]
    %v233 = vld [vmem:[#allocation5 + $0x68] sm:$0xff]
    %v234 = vld [vmem:[#allocation5 + $0x70] sm:$0xff]
    %v235 = vld [vmem:[#allocation5 + $0x78] sm:$0xff]
    %v236 = vld [vmem:[#allocation5 + $0x80] sm:$0xff]
    %v237 = vld [vmem:[#allocation5 + $0x88] sm:$0xff]
    %v238 = vld [vmem:[#allocation5 + $0x90] sm:$0xff]
    %v239 = vld [vmem:[#allocation5 + $0x98] sm:$0xff]
    %v240 = vld [vmem:[#allocation5 + $0xa0] sm:$0xff]
    %v241 = vld [vmem:[#allocation5 + $0xa8] sm:$0xff]
    %v242 = vld [vmem:[#allocation5 + $0xb0] sm:$0xff]
    %v243 = vld [vmem:[#allocation5 + $0xb8] sm:$0xff]
    %v244 = vld [vmem:[#allocation5 + $0xc0] sm:$0xff]
    %v245 = vld [vmem:[#allocation5 + $0xc8] sm:$0xff]
    %v246 = vld [vmem:[#allocation5 + $0xd0] sm:$0xff]
    %v247 = vld [vmem:[#allocation5 + $0xd8] sm:$0xff]
    %v248 = vld [vmem:[#allocation5 + $0xe0] sm:$0xff]
    %v249 = vld [vmem:[#allocation5 + $0xe8] sm:$0xff]
    %v250 = vld [vmem:[#allocation5 + $0xf0] sm:$0xff]
    %v251 = vld [vmem:[#allocation5 + $0xf8] sm:$0xff]
    %v252 = vld [vmem:[#allocation8] sm:$0xff]
    %v253 = vld [vmem:[#allocation8 + $0x8] sm:$0xff]
    %v254 = vld [vmem:[#allocation8 + $0x10] sm:$0xff]
    %v255 = vld [vmem:[#allocation8 + $0x18] sm:$0xff]
    %v256 = vld [vmem:[#allocation8 + $0x20] sm:$0xff]
    %v257 = vld [vmem:[#allocation8 + $0x28] sm:$0xff]
    %v258 = vld [vmem:[#allocation8 + $0x30] sm:$0xff]
    %v259 = vld [vmem:[#allocation8 + $0x38] sm:$0xff]
    %v260 = vld [vmem:[#allocation8 + $0x40] sm:$0xff]
    %v261 = vld [vmem:[#allocation8 + $0x48] sm:$0xff]
    %v262 = vld [vmem:[#allocation8 + $0x50] sm:$0xff]
    %v263 = vld [vmem:[#allocation8 + $0x58] sm:$0xff]
    %v264 = vld [vmem:[#allocation8 + $0x60] sm:$0xff]
    %v265 = vld [vmem:[#allocation8 + $0x68] sm:$0xff]
    %v266 = vld [vmem:[#allocation8 + $0x70] sm:$0xff]
    %v267 = vld [vmem:[#allocation8 + $0x78] sm:$0xff]
    %v268 = vld [vmem:[#allocation8 + $0x80] sm:$0xff]
    %v269 = vld [vmem:[#allocation8 + $0x88] sm:$0xff]
    %v270 = vld [vmem:[#allocation8 + $0x90] sm:$0xff]
    %v271 = vld [vmem:[#allocation8 + $0x98] sm:$0xff]
    %v272 = vld [vmem:[#allocation8 + $0xa0] sm:$0xff]
    %v273 = vld [vmem:[#allocation8 + $0xa8] sm:$0xff]
    %v274 = vld [vmem:[#allocation8 + $0xb0] sm:$0xff]
    %v275 = vld [vmem:[#allocation8 + $0xb8] sm:$0xff]
    %v276 = vld [vmem:[#allocation8 + $0xc0] sm:$0xff]
    %v277 = vld [vmem:[#allocation8 + $0xc8] sm:$0xff]
    %v278 = vld [vmem:[#allocation8 + $0xd0] sm:$0xff]
    %v279 = vld [vmem:[#allocation8 + $0xd8] sm:$0xff]
    %v280 = vld [vmem:[#allocation8 + $0xe0] sm:$0xff]
    %v281 = vld [vmem:[#allocation8 + $0xe8] sm:$0xff]
    %v282 = vld [vmem:[#allocation8 + $0xf0] sm:$0xff]
    %v283 = vld [vmem:[#allocation8 + $0xf8] sm:$0xff]
    %v316 = vunpack.c.l.b16 %v220
    %v317 = vunpack.c.h.b16 %v220
    %v318 = vunpack.c.l.b16 %v221
    %v319 = vunpack.c.h.b16 %v221
    %v320 = vunpack.c.l.b16 %v222
    %v321 = vunpack.c.h.b16 %v222
    %v322 = vunpack.c.l.b16 %v223
    %v323 = vunpack.c.h.b16 %v223
    %v324 = vunpack.c.l.b16 %v224
    %v325 = vunpack.c.h.b16 %v224
    %v326 = vunpack.c.l.b16 %v225
    %v327 = vunpack.c.h.b16 %v225
    %v328 = vunpack.c.l.b16 %v226
    %v329 = vunpack.c.h.b16 %v226
    %v330 = vunpack.c.l.b16 %v227
    %v331 = vunpack.c.h.b16 %v227
    %v332 = vunpack.c.l.b16 %v228
    %v333 = vunpack.c.h.b16 %v228
    %v334 = vunpack.c.l.b16 %v229
    %v335 = vunpack.c.h.b16 %v229
    %v336 = vunpack.c.l.b16 %v230
    %v337 = vunpack.c.h.b16 %v230
    %v338 = vunpack.c.l.b16 %v231
    %v339 = vunpack.c.h.b16 %v231
    %v340 = vunpack.c.l.b16 %v232
    %v341 = vunpack.c.h.b16 %v232
    %v342 = vunpack.c.l.b16 %v233
    %v343 = vunpack.c.h.b16 %v233
    %v344 = vunpack.c.l.b16 %v234
    %v345 = vunpack.c.h.b16 %v234
    %v346 = vunpack.c.l.b16 %v235
    %v347 = vunpack.c.h.b16 %v235
    %v348 = vunpack.c.l.b16 %v236
    %v349 = vunpack.c.h.b16 %v236
    %v350 = vunpack.c.l.b16 %v237
    %v351 = vunpack.c.h.b16 %v237
    %v352 = vunpack.c.l.b16 %v238
    %v353 = vunpack.c.h.b16 %v238
    %v354 = vunpack.c.l.b16 %v239
    %v355 = vunpack.c.h.b16 %v239
    %v356 = vunpack.c.l.b16 %v240
    %v357 = vunpack.c.h.b16 %v240
    %v358 = vunpack.c.l.b16 %v241
    %v359 = vunpack.c.h.b16 %v241
    %v360 = vunpack.c.l.b16 %v242
    %v361 = vunpack.c.h.b16 %v242
    %v362 = vunpack.c.l.b16 %v243
    %v363 = vunpack.c.h.b16 %v243
    %v364 = vunpack.c.l.b16 %v244
    %v365 = vunpack.c.h.b16 %v244
    %v366 = vunpack.c.l.b16 %v245
    %v367 = vunpack.c.h.b16 %v245
    %v368 = vunpack.c.l.b16 %v246
    %v369 = vunpack.c.h.b16 %v246
    %v370 = vunpack.c.l.b16 %v247
    %v371 = vunpack.c.h.b16 %v247
    %v372 = vunpack.c.l.b16 %v248
    %v373 = vunpack.c.h.b16 %v248
    %v374 = vunpack.c.l.b16 %v249
    %v375 = vunpack.c.h.b16 %v249
    %v376 = vunpack.c.l.b16 %v250
    %v377 = vunpack.c.h.b16 %v250
    %v378 = vunpack.c.l.b16 %v251
    %v379 = vunpack.c.h.b16 %v251
    %v380 = vpack.c.b16 %v318, %v316
    %v381 = vpack.c.b16 %v319, %v317
    %v382 = vpack.c.b16 %v322, %v320
    %v383 = vpack.c.b16 %v323, %v321
    %v384 = vpack.c.b16 %v326, %v324
    %v385 = vpack.c.b16 %v327, %v325
    %v386 = vpack.c.b16 %v330, %v328
    %v387 = vpack.c.b16 %v331, %v329
    %v388 = vpack.c.b16 %v334, %v332
    %v389 = vpack.c.b16 %v335, %v333
    %v390 = vpack.c.b16 %v338, %v336
    %v391 = vpack.c.b16 %v339, %v337
    %v392 = vpack.c.b16 %v342, %v340
    %v393 = vpack.c.b16 %v343, %v341
    %v394 = vpack.c.b16 %v346, %v344
    %v395 = vpack.c.b16 %v347, %v345
    %v396 = vpack.c.b16 %v350, %v348
    %v397 = vpack.c.b16 %v351, %v349
    %v398 = vpack.c.b16 %v354, %v352
    %v399 = vpack.c.b16 %v355, %v353
    %v400 = vpack.c.b16 %v358, %v356
    %v401 = vpack.c.b16 %v359, %v357
    %v402 = vpack.c.b16 %v362, %v360
    %v403 = vpack.c.b16 %v363, %v361
    %v404 = vpack.c.b16 %v366, %v364
    %v405 = vpack.c.b16 %v367, %v365
    %v406 = vpack.c.b16 %v370, %v368
    %v407 = vpack.c.b16 %v371, %v369
    %v408 = vpack.c.b16 %v374, %v372
    %v409 = vpack.c.b16 %v375, %v373
    %v410 = vpack.c.b16 %v378, %v376
    %v411 = vpack.c.b16 %v379, %v377
    %444 = vxpose.xlu0.c.b16.start [1/8] %v380, 128
    %445 = vxpose.xlu0.c.b16.cont [2/8] %v382, 128
    %446 = vxpose.xlu0.c.b16.cont [3/8] %v384, 128
    %447 = vxpose.xlu0.c.b16.cont [4/8] %v386, 128
    %448 = vxpose.xlu0.c.b16.cont [5/8] %v388, 128
    %449 = vxpose.xlu0.c.b16.cont [6/8] %v390, 128
    %450 = vxpose.xlu0.c.b16.cont [7/8] %v392, 128
    %451 = vxpose.xlu0.c.b16.end [8/8] %v394, 128
    %v452 = vpop.trf.xlu0
    %v453 = vpop.trf.xlu0
    %v454 = vpop.trf.xlu0
    %v455 = vpop.trf.xlu0
    %v456 = vpop.trf.xlu0
    %v457 = vpop.trf.xlu0
    %v458 = vpop.trf.xlu0
    %v459 = vpop.trf.xlu0
    %460 = vxpose.xlu0.c.b16.start [1/8] %v381, 128
    %461 = vxpose.xlu0.c.b16.cont [2/8] %v383, 128
    %462 = vxpose.xlu0.c.b16.cont [3/8] %v385, 128
    %463 = vxpose.xlu0.c.b16.cont [4/8] %v387, 128
    %464 = vxpose.xlu0.c.b16.cont [5/8] %v389, 128
    %465 = vxpose.xlu0.c.b16.cont [6/8] %v391, 128
    %466 = vxpose.xlu0.c.b16.cont [7/8] %v393, 128
    %467 = vxpose.xlu0.c.b16.end [8/8] %v395, 128
    %v468 = vpop.trf.xlu0
    %v469 = vpop.trf.xlu0
    %v470 = vpop.trf.xlu0
    %v471 = vpop.trf.xlu0
    %v472 = vpop.trf.xlu0
    %v473 = vpop.trf.xlu0
    %v474 = vpop.trf.xlu0
    %v475 = vpop.trf.xlu0
    %476 = vxpose.xlu0.c.b16.start [1/8] %v396, 128
    %477 = vxpose.xlu0.c.b16.cont [2/8] %v398, 128
    %478 = vxpose.xlu0.c.b16.cont [3/8] %v400, 128
    %479 = vxpose.xlu0.c.b16.cont [4/8] %v402, 128
    %480 = vxpose.xlu0.c.b16.cont [5/8] %v404, 128
    %481 = vxpose.xlu0.c.b16.cont [6/8] %v406, 128
    %482 = vxpose.xlu0.c.b16.cont [7/8] %v408, 128
    %483 = vxpose.xlu0.c.b16.end [8/8] %v410, 128
    %v484 = vpop.trf.xlu0
    %v485 = vpop.trf.xlu0
    %v486 = vpop.trf.xlu0
    %v487 = vpop.trf.xlu0
    %v488 = vpop.trf.xlu0
    %v489 = vpop.trf.xlu0
    %v490 = vpop.trf.xlu0
    %v491 = vpop.trf.xlu0
    %492 = vxpose.xlu0.c.b16.start [1/8] %v397, 128
    %493 = vxpose.xlu0.c.b16.cont [2/8] %v399, 128
    %494 = vxpose.xlu0.c.b16.cont [3/8] %v401, 128
    %495 = vxpose.xlu0.c.b16.cont [4/8] %v403, 128
    %496 = vxpose.xlu0.c.b16.cont [5/8] %v405, 128
    %497 = vxpose.xlu0.c.b16.cont [6/8] %v407, 128
    %498 = vxpose.xlu0.c.b16.cont [7/8] %v409, 128
    %499 = vxpose.xlu0.c.b16.end [8/8] %v411, 128
    %v500 = vpop.trf.xlu0
    %v501 = vpop.trf.xlu0
    %v502 = vpop.trf.xlu0
    %v503 = vpop.trf.xlu0
    %v504 = vpop.trf.xlu0
    %v505 = vpop.trf.xlu0
    %v506 = vpop.trf.xlu0
    %v507 = vpop.trf.xlu0
    %v540 = vunpack.c.l.b16 %v252
    %v541 = vunpack.c.h.b16 %v252
    %v542 = vunpack.c.l.b16 %v253
    %v543 = vunpack.c.h.b16 %v253
    %v544 = vunpack.c.l.b16 %v254
    %v545 = vunpack.c.h.b16 %v254
    %v546 = vunpack.c.l.b16 %v255
    %v547 = vunpack.c.h.b16 %v255
    %v548 = vunpack.c.l.b16 %v256
    %v549 = vunpack.c.h.b16 %v256
    %v550 = vunpack.c.l.b16 %v257
    %v551 = vunpack.c.h.b16 %v257
    %v552 = vunpack.c.l.b16 %v258
    %v553 = vunpack.c.h.b16 %v258
    %v554 = vunpack.c.l.b16 %v259
    %v555 = vunpack.c.h.b16 %v259
    %v556 = vunpack.c.l.b16 %v260
    %v557 = vunpack.c.h.b16 %v260
    %v558 = vunpack.c.l.b16 %v261
    %v559 = vunpack.c.h.b16 %v261
    %v560 = vunpack.c.l.b16 %v262
    %v561 = vunpack.c.h.b16 %v262
    %v562 = vunpack.c.l.b16 %v263
    %v563 = vunpack.c.h.b16 %v263
    %v564 = vunpack.c.l.b16 %v264
    %v565 = vunpack.c.h.b16 %v264
    %v566 = vunpack.c.l.b16 %v265
    %v567 = vunpack.c.h.b16 %v265
    %v568 = vunpack.c.l.b16 %v266
    %v569 = vunpack.c.h.b16 %v266
    %v570 = vunpack.c.l.b16 %v267
    %v571 = vunpack.c.h.b16 %v267
    %v572 = vunpack.c.l.b16 %v268
    %v573 = vunpack.c.h.b16 %v268
    %v574 = vunpack.c.l.b16 %v269
    %v575 = vunpack.c.h.b16 %v269
    %v576 = vunpack.c.l.b16 %v270
    %v577 = vunpack.c.h.b16 %v270
    %v578 = vunpack.c.l.b16 %v271
    %v579 = vunpack.c.h.b16 %v271
    %v580 = vunpack.c.l.b16 %v272
    %v581 = vunpack.c.h.b16 %v272
    %v582 = vunpack.c.l.b16 %v273
    %v583 = vunpack.c.h.b16 %v273
    %v584 = vunpack.c.l.b16 %v274
    %v585 = vunpack.c.h.b16 %v274
    %v586 = vunpack.c.l.b16 %v275
    %v587 = vunpack.c.h.b16 %v275
    %v588 = vunpack.c.l.b16 %v276
    %v589 = vunpack.c.h.b16 %v276
    %v590 = vunpack.c.l.b16 %v277
    %v591 = vunpack.c.h.b16 %v277
    %v592 = vunpack.c.l.b16 %v278
    %v593 = vunpack.c.h.b16 %v278
    %v594 = vunpack.c.l.b16 %v279
    %v595 = vunpack.c.h.b16 %v279
    %v596 = vunpack.c.l.b16 %v280
    %v597 = vunpack.c.h.b16 %v280
    %v598 = vunpack.c.l.b16 %v281
    %v599 = vunpack.c.h.b16 %v281
    %v600 = vunpack.c.l.b16 %v282
    %v601 = vunpack.c.h.b16 %v282
    %v602 = vunpack.c.l.b16 %v283
    %v603 = vunpack.c.h.b16 %v283
    %v604 = vpack.c.b16 %v542, %v540
    %v605 = vpack.c.b16 %v543, %v541
    %v606 = vpack.c.b16 %v546, %v544
    %v607 = vpack.c.b16 %v547, %v545
    %v608 = vpack.c.b16 %v550, %v548
    %v609 = vpack.c.b16 %v551, %v549
    %v610 = vpack.c.b16 %v554, %v552
    %v611 = vpack.c.b16 %v555, %v553
    %v612 = vpack.c.b16 %v558, %v556
    %v613 = vpack.c.b16 %v559, %v557
    %v614 = vpack.c.b16 %v562, %v560
    %v615 = vpack.c.b16 %v563, %v561
    %v616 = vpack.c.b16 %v566, %v564
    %v617 = vpack.c.b16 %v567, %v565
    %v618 = vpack.c.b16 %v570, %v568
    %v619 = vpack.c.b16 %v571, %v569
    %v620 = vpack.c.b16 %v574, %v572
    %v621 = vpack.c.b16 %v575, %v573
    %v622 = vpack.c.b16 %v578, %v576
    %v623 = vpack.c.b16 %v579, %v577
    %v624 = vpack.c.b16 %v582, %v580
    %v625 = vpack.c.b16 %v583, %v581
    %v626 = vpack.c.b16 %v586, %v584
    %v627 = vpack.c.b16 %v587, %v585
    %v628 = vpack.c.b16 %v590, %v588
    %v629 = vpack.c.b16 %v591, %v589
    %v630 = vpack.c.b16 %v594, %v592
    %v631 = vpack.c.b16 %v595, %v593
    %v632 = vpack.c.b16 %v598, %v596
    %v633 = vpack.c.b16 %v599, %v597
    %v634 = vpack.c.b16 %v602, %v600
    %v635 = vpack.c.b16 %v603, %v601
    %668 = vmatprep.subr.bf16.mxu0 %v605
    %669 = vmatpush1.bf16.msra.mxu0 %v604
    %670 = vmatprep.subr.bf16.mxu0 %v607
    %671 = vmatpush1.bf16.msra.mxu0 %v606
    %672 = vmatprep.subr.bf16.mxu0 %v609
    %673 = vmatpush1.bf16.msra.mxu0 %v608
    %674 = vmatprep.subr.bf16.mxu0 %v611
    %675 = vmatpush1.bf16.msra.mxu0 %v610
    %676 = vmatprep.subr.bf16.mxu0 %v613
    %677 = vmatpush1.bf16.msra.mxu0 %v612
    %678 = vmatprep.subr.bf16.mxu0 %v615
    %679 = vmatpush1.bf16.msra.mxu0 %v614
    %680 = vmatprep.subr.bf16.mxu0 %v617
    %681 = vmatpush1.bf16.msra.mxu0 %v616
    %682 = vmatprep.subr.bf16.mxu0 %v619
    %683 = vmatpush1.bf16.msra.mxu0 %v618
    %684 = vmatprep.subr.bf16.mxu0 %v621
    %685 = vmatpush1.bf16.msra.mxu0 %v620
    %686 = vmatprep.subr.bf16.mxu0 %v623
    %687 = vmatpush1.bf16.msra.mxu0 %v622
    %688 = vmatprep.subr.bf16.mxu0 %v625
    %689 = vmatpush1.bf16.msra.mxu0 %v624
    %690 = vmatprep.subr.bf16.mxu0 %v627
    %691 = vmatpush1.bf16.msra.mxu0 %v626
    %692 = vmatprep.subr.bf16.mxu0 %v629
    %693 = vmatpush1.bf16.msra.mxu0 %v628
    %694 = vmatprep.subr.bf16.mxu0 %v631
    %695 = vmatpush1.bf16.msra.mxu0 %v630
    %696 = vmatprep.subr.bf16.mxu0 %v633
    %697 = vmatpush1.bf16.msra.mxu0 %v632
    %698 = vmatprep.subr.bf16.mxu0 %v635
    %699 = vmatpush1.bf16.msra.mxu0 %v634
    %700 = vmatprep.mubr.bf16.mxu0 %v484
    %701 = vmatmul.mubr.bf16.gmra.mrb[0].mxu0 %v452
    %v702 = vpop.f32.mrb[0].mxu0
    %v703 = vadd.f32 0.0, %v702
    %v704 = vpop.f32.mrb[0].mxu0
    %v705 = vadd.f32 0.0, %v704
    %v706 = vpop.f32.mrb[0].mxu0
    %v707 = vadd.f32 0.0, %v706
    %v708 = vpop.f32.mrb[0].mxu0
    %v709 = vadd.f32 0.0, %v708
    %710 = vmatprep.mubr.bf16.mxu0 %v485
    %711 = vmatmul.mubr.bf16.gmra.mrb[0].mxu0 %v453
    %v712 = vpop.f32.mrb[0].mxu0
    %v713 = vadd.f32 0.0, %v712
    %v714 = vpop.f32.mrb[0].mxu0
    %v715 = vadd.f32 0.0, %v714
    %v716 = vpop.f32.mrb[0].mxu0
    %v717 = vadd.f32 0.0, %v716
    %v718 = vpop.f32.mrb[0].mxu0
    %v719 = vadd.f32 0.0, %v718
    %720 = vmatprep.mubr.bf16.mxu0 %v486
    %721 = vmatmul.mubr.bf16.gmra.mrb[0].mxu0 %v454
    %v722 = vpop.f32.mrb[0].mxu0
    %v723 = vadd.f32 0.0, %v722
    %v724 = vpop.f32.mrb[0].mxu0
    %v725 = vadd.f32 0.0, %v724
    %v726 = vpop.f32.mrb[0].mxu0
    %v727 = vadd.f32 0.0, %v726
    %v728 = vpop.f32.mrb[0].mxu0
    %v729 = vadd.f32 0.0, %v728
    %730 = vmatprep.mubr.bf16.mxu0 %v487
    %731 = vmatmul.mubr.bf16.gmra.mrb[0].mxu0 %v455
    %v732 = vpop.f32.mrb[0].mxu0
    %v733 = vadd.f32 0.0, %v732
    %v734 = vpop.f32.mrb[0].mxu0
    %v735 = vadd.f32 0.0, %v734
    %v736 = vpop.f32.mrb[0].mxu0
    %v737 = vadd.f32 0.0, %v736
    %v738 = vpop.f32.mrb[0].mxu0
    %v739 = vadd.f32 0.0, %v738
    %740 = vmatprep.mubr.bf16.mxu0 %v488
    %741 = vmatmul.mubr.bf16.gmra.mrb[0].mxu0 %v456
    %v742 = vpop.f32.mrb[0].mxu0
    %v743 = vadd.f32 0.0, %v742
    %v744 = vpop.f32.mrb[0].mxu0
    %v745 = vadd.f32 0.0, %v744
    %v746 = vpop.f32.mrb[0].mxu0
    %v747 = vadd.f32 0.0, %v746
    %v748 = vpop.f32.mrb[0].mxu0
    %v749 = vadd.f32 0.0, %v748
    %750 = vmatprep.mubr.bf16.mxu0 %v489
    %751 = vmatmul.mubr.bf16.gmra.mrb[0].mxu0 %v457
    %v752 = vpop.f32.mrb[0].mxu0
    %v753 = vadd.f32 0.0, %v752
    %v754 = vpop.f32.mrb[0].mxu0
    %v755 = vadd.f32 0.0, %v754
    %v756 = vpop.f32.mrb[0].mxu0
    %v757 = vadd.f32 0.0, %v756
    %v758 = vpop.f32.mrb[0].mxu0
    %v759 = vadd.f32 0.0, %v758
    %760 = vmatprep.mubr.bf16.mxu0 %v490
    %761 = vmatmul.mubr.bf16.gmra.mrb[0].mxu0 %v458
    %v762 = vpop.f32.mrb[0].mxu0
    %v763 = vadd.f32 0.0, %v762
    %v764 = vpop.f32.mrb[0].mxu0
    %v765 = vadd.f32 0.0, %v764
    %v766 = vpop.f32.mrb[0].mxu0
    %v767 = vadd.f32 0.0, %v766
    %v768 = vpop.f32.mrb[0].mxu0
    %v769 = vadd.f32 0.0, %v768
    %770 = vmatprep.mubr.bf16.mxu0 %v491
    %771 = vmatmul.mubr.bf16.gmra.mrb[0].mxu0 %v459
    %v772 = vpop.f32.mrb[0].mxu0
    %v773 = vadd.f32 0.0, %v772
    %v774 = vpop.f32.mrb[0].mxu0
    %v775 = vadd.f32 0.0, %v774
    %v776 = vpop.f32.mrb[0].mxu0
    %v777 = vadd.f32 0.0, %v776
    %v778 = vpop.f32.mrb[0].mxu0
    %v779 = vadd.f32 0.0, %v778
    %780 = vmatprep.mubr.bf16.mxu0 %v500
    %781 = vmatmul.mubr.bf16.gmra.mrb[0].mxu0 %v468
    %v782 = vpop.f32.mrb[0].mxu0
    %v783 = vadd.f32 0.0, %v782
    %v784 = vpop.f32.mrb[0].mxu0
    %v785 = vadd.f32 0.0, %v784
    %v786 = vpop.f32.mrb[0].mxu0
    %v787 = vadd.f32 0.0, %v786
    %v788 = vpop.f32.mrb[0].mxu0
    %v789 = vadd.f32 0.0, %v788
    %790 = vmatprep.mubr.bf16.mxu0 %v501
    %791 = vmatmul.mubr.bf16.gmra.mrb[0].mxu0 %v469
    %v792 = vpop.f32.mrb[0].mxu0
    %v793 = vadd.f32 0.0, %v792
    %v794 = vpop.f32.mrb[0].mxu0
    %v795 = vadd.f32 0.0, %v794
    %v796 = vpop.f32.mrb[0].mxu0
    %v797 = vadd.f32 0.0, %v796
    %v798 = vpop.f32.mrb[0].mxu0
    %v799 = vadd.f32 0.0, %v798
    %800 = vmatprep.mubr.bf16.mxu0 %v502
    %801 = vmatmul.mubr.bf16.gmra.mrb[0].mxu0 %v470
    %v802 = vpop.f32.mrb[0].mxu0
    %v803 = vadd.f32 0.0, %v802
    %v804 = vpop.f32.mrb[0].mxu0
    %v805 = vadd.f32 0.0, %v804
    %v806 = vpop.f32.mrb[0].mxu0
    %v807 = vadd.f32 0.0, %v806
    %v808 = vpop.f32.mrb[0].mxu0
    %v809 = vadd.f32 0.0, %v808
    %810 = vmatprep.mubr.bf16.mxu0 %v503
    %811 = vmatmul.mubr.bf16.gmra.mrb[0].mxu0 %v471
    %v812 = vpop.f32.mrb[0].mxu0
    %v813 = vadd.f32 0.0, %v812
    %v814 = vpop.f32.mrb[0].mxu0
    %v815 = vadd.f32 0.0, %v814
    %v816 = vpop.f32.mrb[0].mxu0
    %v817 = vadd.f32 0.0, %v816
    %v818 = vpop.f32.mrb[0].mxu0
    %v819 = vadd.f32 0.0, %v818
    %820 = vmatprep.mubr.bf16.mxu0 %v504
    %821 = vmatmul.mubr.bf16.gmra.mrb[0].mxu0 %v472
    %v822 = vpop.f32.mrb[0].mxu0
    %v823 = vadd.f32 0.0, %v822
    %v824 = vpop.f32.mrb[0].mxu0
    %v825 = vadd.f32 0.0, %v824
    %v826 = vpop.f32.mrb[0].mxu0
    %v827 = vadd.f32 0.0, %v826
    %v828 = vpop.f32.mrb[0].mxu0
    %v829 = vadd.f32 0.0, %v828
    %830 = vmatprep.mubr.bf16.mxu0 %v505
    %831 = vmatmul.mubr.bf16.gmra.mrb[0].mxu0 %v473
    %v832 = vpop.f32.mrb[0].mxu0
    %v833 = vadd.f32 0.0, %v832
    %v834 = vpop.f32.mrb[0].mxu0
    %v835 = vadd.f32 0.0, %v834
    %v836 = vpop.f32.mrb[0].mxu0
    %v837 = vadd.f32 0.0, %v836
    %v838 = vpop.f32.mrb[0].mxu0
    %v839 = vadd.f32 0.0, %v838
    %840 = vmatprep.mubr.bf16.mxu0 %v506
    %841 = vmatmul.mubr.bf16.gmra.mrb[0].mxu0 %v474
    %v842 = vpop.f32.mrb[0].mxu0
    %v843 = vadd.f32 0.0, %v842
    %v844 = vpop.f32.mrb[0].mxu0
    %v845 = vadd.f32 0.0, %v844
    %v846 = vpop.f32.mrb[0].mxu0
    %v847 = vadd.f32 0.0, %v846
    %v848 = vpop.f32.mrb[0].mxu0
    %v849 = vadd.f32 0.0, %v848
    %850 = vmatprep.mubr.bf16.mxu0 %v507
    %851 = vmatmul.mubr.bf16.gmra.mrb[0].mxu0 %v475
    %v852 = vpop.f32.mrb[0].mxu0
    %v853 = vadd.f32 0.0, %v852
    %v854 = vpop.f32.mrb[0].mxu0
    %v855 = vadd.f32 0.0, %v854
    %v856 = vpop.f32.mrb[0].mxu0
    %v857 = vadd.f32 0.0, %v856
    %v858 = vpop.f32.mrb[0].mxu0
    %v859 = vadd.f32 0.0, %v858
    %860 = vdwg.mxu0
    %v861 = vadd.f32 %v156, %v703
    %v862 = vadd.f32 %v157, %v705
    %v863 = vadd.f32 %v158, %v707
    %v864 = vadd.f32 %v159, %v709
    %v865 = vadd.f32 %v160, %v713
    %v866 = vadd.f32 %v161, %v715
    %v867 = vadd.f32 %v162, %v717
    %v868 = vadd.f32 %v163, %v719
    %v869 = vadd.f32 %v164, %v723
    %v870 = vadd.f32 %v165, %v725
    %v871 = vadd.f32 %v166, %v727
    %v872 = vadd.f32 %v167, %v729
    %v873 = vadd.f32 %v168, %v733
    %v874 = vadd.f32 %v169, %v735
    %v875 = vadd.f32 %v170, %v737
    %v876 = vadd.f32 %v171, %v739
    %v877 = vadd.f32 %v172, %v743
    %v878 = vadd.f32 %v173, %v745
    %v879 = vadd.f32 %v174, %v747
    %v880 = vadd.f32 %v175, %v749
    %v881 = vadd.f32 %v176, %v753
    %v882 = vadd.f32 %v177, %v755
    %v883 = vadd.f32 %v178, %v757
    %v884 = vadd.f32 %v179, %v759
    %v885 = vadd.f32 %v180, %v763
    %v886 = vadd.f32 %v181, %v765
    %v887 = vadd.f32 %v182, %v767
    %v888 = vadd.f32 %v183, %v769
    %v889 = vadd.f32 %v184, %v773
    %v890 = vadd.f32 %v185, %v775
    %v891 = vadd.f32 %v186, %v777
    %v892 = vadd.f32 %v187, %v779
    %v893 = vadd.f32 %v188, %v783
    %v894 = vadd.f32 %v189, %v785
    %v895 = vadd.f32 %v190, %v787
    %v896 = vadd.f32 %v191, %v789
    %v897 = vadd.f32 %v192, %v793
    %v898 = vadd.f32 %v193, %v795
    %v899 = vadd.f32 %v194, %v797
    %v900 = vadd.f32 %v195, %v799
    %v901 = vadd.f32 %v196, %v803
    %v902 = vadd.f32 %v197, %v805
    %v903 = vadd.f32 %v198, %v807
    %v904 = vadd.f32 %v199, %v809
    %v905 = vadd.f32 %v200, %v813
    %v906 = vadd.f32 %v201, %v815
    %v907 = vadd.f32 %v202, %v817
    %v908 = vadd.f32 %v203, %v819
    %v909 = vadd.f32 %v204, %v823
    %v910 = vadd.f32 %v205, %v825
    %v911 = vadd.f32 %v206, %v827
    %v912 = vadd.f32 %v207, %v829
    %v913 = vadd.f32 %v208, %v833
    %v914 = vadd.f32 %v209, %v835
    %v915 = vadd.f32 %v210, %v837
    %v916 = vadd.f32 %v211, %v839
    %v917 = vadd.f32 %v212, %v843
    %v918 = vadd.f32 %v213, %v845
    %v919 = vadd.f32 %v214, %v847
    %v920 = vadd.f32 %v215, %v849
    %v921 = vadd.f32 %v216, %v853
    %v922 = vadd.f32 %v217, %v855
    %v923 = vadd.f32 %v218, %v857
    %v924 = vadd.f32 %v219, %v859
    %925 = vst [vmem:[#allocation11] sm:$0xff] %v861
    %926 = vst [vmem:[#allocation11 + $0x8] sm:$0xff] %v862
    %927 = vst [vmem:[#allocation11 + $0x10] sm:$0xff] %v863
    %928 = vst [vmem:[#allocation11 + $0x18] sm:$0xff] %v864
    %929 = vst [vmem:[#allocation11 + $0x20] sm:$0xff] %v865
    %930 = vst [vmem:[#allocation11 + $0x28] sm:$0xff] %v866
    %931 = vst [vmem:[#allocation11 + $0x30] sm:$0xff] %v867
    %932 = vst [vmem:[#allocation11 + $0x38] sm:$0xff] %v868
    %933 = vst [vmem:[#allocation11 + $0x40] sm:$0xff] %v869
    %934 = vst [vmem:[#allocation11 + $0x48] sm:$0xff] %v870
    %935 = vst [vmem:[#allocation11 + $0x50] sm:$0xff] %v871
    %936 = vst [vmem:[#allocation11 + $0x58] sm:$0xff] %v872
    %937 = vst [vmem:[#allocation11 + $0x60] sm:$0xff] %v873
    %938 = vst [vmem:[#allocation11 + $0x68] sm:$0xff] %v874
    %939 = vst [vmem:[#allocation11 + $0x70] sm:$0xff] %v875
    %940 = vst [vmem:[#allocation11 + $0x78] sm:$0xff] %v876
    %941 = vst [vmem:[#allocation11 + $0x80] sm:$0xff] %v877
    %942 = vst [vmem:[#allocation11 + $0x88] sm:$0xff] %v878
    %943 = vst [vmem:[#allocation11 + $0x90] sm:$0xff] %v879
    %944 = vst [vmem:[#allocation11 + $0x98] sm:$0xff] %v880
    %945 = vst [vmem:[#allocation11 + $0xa0] sm:$0xff] %v881
    %946 = vst [vmem:[#allocation11 + $0xa8] sm:$0xff] %v882
    %947 = vst [vmem:[#allocation11 + $0xb0] sm:$0xff] %v883
    %948 = vst [vmem:[#allocation11 + $0xb8] sm:$0xff] %v884
    %949 = vst [vmem:[#allocation11 + $0xc0] sm:$0xff] %v885
    %950 = vst [vmem:[#allocation11 + $0xc8] sm:$0xff] %v886
    %951 = vst [vmem:[#allocation11 + $0xd0] sm:$0xff] %v887
    %952 = vst [vmem:[#allocation11 + $0xd8] sm:$0xff] %v888
    %953 = vst [vmem:[#allocation11 + $0xe0] sm:$0xff] %v889
    %954 = vst [vmem:[#allocation11 + $0xe8] sm:$0xff] %v890
    %955 = vst [vmem:[#allocation11 + $0xf0] sm:$0xff] %v891
    %956 = vst [vmem:[#allocation11 + $0xf8] sm:$0xff] %v892
    %957 = vst [vmem:[#allocation11 + $0x100] sm:$0xff] %v893
    %958 = vst [vmem:[#allocation11 + $0x108] sm:$0xff] %v894
    %959 = vst [vmem:[#allocation11 + $0x110] sm:$0xff] %v895
    %960 = vst [vmem:[#allocation11 + $0x118] sm:$0xff] %v896
    %961 = vst [vmem:[#allocation11 + $0x120] sm:$0xff] %v897
    %962 = vst [vmem:[#allocation11 + $0x128] sm:$0xff] %v898
    %963 = vst [vmem:[#allocation11 + $0x130] sm:$0xff] %v899
    %964 = vst [vmem:[#allocation11 + $0x138] sm:$0xff] %v900
    %965 = vst [vmem:[#allocation11 + $0x140] sm:$0xff] %v901
    %966 = vst [vmem:[#allocation11 + $0x148] sm:$0xff] %v902
    %967 = vst [vmem:[#allocation11 + $0x150] sm:$0xff] %v903
    %968 = vst [vmem:[#allocation11 + $0x158] sm:$0xff] %v904
    %969 = vst [vmem:[#allocation11 + $0x160] sm:$0xff] %v905
    %970 = vst [vmem:[#allocation11 + $0x168] sm:$0xff] %v906
    %971 = vst [vmem:[#allocation11 + $0x170] sm:$0xff] %v907
    %972 = vst [vmem:[#allocation11 + $0x178] sm:$0xff] %v908
    %973 = vst [vmem:[#allocation11 + $0x180] sm:$0xff] %v909
    %974 = vst [vmem:[#allocation11 + $0x188] sm:$0xff] %v910
    %975 = vst [vmem:[#allocation11 + $0x190] sm:$0xff] %v911
    %976 = vst [vmem:[#allocation11 + $0x198] sm:$0xff] %v912
    %977 = vst [vmem:[#allocation11 + $0x1a0] sm:$0xff] %v913
    %978 = vst [vmem:[#allocation11 + $0x1a8] sm:$0xff] %v914
    %979 = vst [vmem:[#allocation11 + $0x1b0] sm:$0xff] %v915
    %980 = vst [vmem:[#allocation11 + $0x1b8] sm:$0xff] %v916
    %981 = vst [vmem:[#allocation11 + $0x1c0] sm:$0xff] %v917
    %982 = vst [vmem:[#allocation11 + $0x1c8] sm:$0xff] %v918
    %983 = vst [vmem:[#allocation11 + $0x1d0] sm:$0xff] %v919
    %984 = vst [vmem:[#allocation11 + $0x1d8] sm:$0xff] %v920
    %985 = vst [vmem:[#allocation11 + $0x1e0] sm:$0xff] %v921
    %986 = vst [vmem:[#allocation11 + $0x1e8] sm:$0xff] %v922
    %987 = vst [vmem:[#allocation11 + $0x1f0] sm:$0xff] %v923
    %988 = vst [vmem:[#allocation11 + $0x1f8] sm:$0xff] %v924
    // Predicated region
    $region30: #{tpu_custom_call.1} parent=1 // pred_check
      %p989 = pneg %p88
    $region31: #{tpu_custom_call.1} parent=1 // pred_check_branch
      %991 = sbr.rel (%p989) target = $region33
    $region32: #{tpu_custom_call.1} parent=1 // pred_region
      %v992 = vld [vmem:[#allocation10] sm:$0xff]
      %v993 = vld [vmem:[#allocation10 + $0x8] sm:$0xff]
      %v994 = vld [vmem:[#allocation10 + $0x10] sm:$0xff]
      %v995 = vld [vmem:[#allocation10 + $0x18] sm:$0xff]
      %v996 = vld [vmem:[#allocation10 + $0x20] sm:$0xff]
      %v997 = vld [vmem:[#allocation10 + $0x28] sm:$0xff]
      %v998 = vld [vmem:[#allocation10 + $0x30] sm:$0xff]
      %v999 = vld [vmem:[#allocation10 + $0x38] sm:$0xff]
      %v1000 = vld [vmem:[#allocation10 + $0x40] sm:$0xff]
      %v1001 = vld [vmem:[#allocation10 + $0x48] sm:$0xff]
      %v1002 = vld [vmem:[#allocation10 + $0x50] sm:$0xff]
      %v1003 = vld [vmem:[#allocation10 + $0x58] sm:$0xff]
      %v1004 = vld [vmem:[#allocation10 + $0x60] sm:$0xff]
      %v1005 = vld [vmem:[#allocation10 + $0x68] sm:$0xff]
      %v1006 = vld [vmem:[#allocation10 + $0x70] sm:$0xff]
      %v1007 = vld [vmem:[#allocation10 + $0x78] sm:$0xff]
      %v1008 = vld [vmem:[#allocation10 + $0x80] sm:$0xff]
      %v1009 = vld [vmem:[#allocation10 + $0x88] sm:$0xff]
      %v1010 = vld [vmem:[#allocation10 + $0x90] sm:$0xff]
      %v1011 = vld [vmem:[#allocation10 + $0x98] sm:$0xff]
      %v1012 = vld [vmem:[#allocation10 + $0xa0] sm:$0xff]
      %v1013 = vld [vmem:[#allocation10 + $0xa8] sm:$0xff]
      %v1014 = vld [vmem:[#allocation10 + $0xb0] sm:$0xff]
      %v1015 = vld [vmem:[#allocation10 + $0xb8] sm:$0xff]
      %v1016 = vld [vmem:[#allocation10 + $0xc0] sm:$0xff]
      %v1017 = vld [vmem:[#allocation10 + $0xc8] sm:$0xff]
      %v1018 = vld [vmem:[#allocation10 + $0xd0] sm:$0xff]
      %v1019 = vld [vmem:[#allocation10 + $0xd8] sm:$0xff]
      %v1020 = vld [vmem:[#allocation10 + $0xe0] sm:$0xff]
      %v1021 = vld [vmem:[#allocation10 + $0xe8] sm:$0xff]
      %v1022 = vld [vmem:[#allocation10 + $0xf0] sm:$0xff]
      %v1023 = vld [vmem:[#allocation10 + $0xf8] sm:$0xff]
      %v1024 = vld [vmem:[#allocation10 + $0x100] sm:$0xff]
      %v1025 = vld [vmem:[#allocation10 + $0x108] sm:$0xff]
      %v1026 = vld [vmem:[#allocation10 + $0x110] sm:$0xff]
      %v1027 = vld [vmem:[#allocation10 + $0x118] sm:$0xff]
      %v1028 = vld [vmem:[#allocation10 + $0x120] sm:$0xff]
      %v1029 = vld [vmem:[#allocation10 + $0x128] sm:$0xff]
      %v1030 = vld [vmem:[#allocation10 + $0x130] sm:$0xff]
      %v1031 = vld [vmem:[#allocation10 + $0x138] sm:$0xff]
      %v1032 = vld [vmem:[#allocation10 + $0x140] sm:$0xff]
      %v1033 = vld [vmem:[#allocation10 + $0x148] sm:$0xff]
      %v1034 = vld [vmem:[#allocation10 + $0x150] sm:$0xff]
      %v1035 = vld [vmem:[#allocation10 + $0x158] sm:$0xff]
      %v1036 = vld [vmem:[#allocation10 + $0x160] sm:$0xff]
      %v1037 = vld [vmem:[#allocation10 + $0x168] sm:$0xff]
      %v1038 = vld [vmem:[#allocation10 + $0x170] sm:$0xff]
      %v1039 = vld [vmem:[#allocation10 + $0x178] sm:$0xff]
      %v1040 = vld [vmem:[#allocation10 + $0x180] sm:$0xff]
      %v1041 = vld [vmem:[#allocation10 + $0x188] sm:$0xff]
      %v1042 = vld [vmem:[#allocation10 + $0x190] sm:$0xff]
      %v1043 = vld [vmem:[#allocation10 + $0x198] sm:$0xff]
      %v1044 = vld [vmem:[#allocation10 + $0x1a0] sm:$0xff]
      %v1045 = vld [vmem:[#allocation10 + $0x1a8] sm:$0xff]
      %v1046 = vld [vmem:[#allocation10 + $0x1b0] sm:$0xff]
      %v1047 = vld [vmem:[#allocation10 + $0x1b8] sm:$0xff]
      %v1048 = vld [vmem:[#allocation10 + $0x1c0] sm:$0xff]
      %v1049 = vld [vmem:[#allocation10 + $0x1c8] sm:$0xff]
      %v1050 = vld [vmem:[#allocation10 + $0x1d0] sm:$0xff]
      %v1051 = vld [vmem:[#allocation10 + $0x1d8] sm:$0xff]
      %v1052 = vld [vmem:[#allocation10 + $0x1e0] sm:$0xff]
      %v1053 = vld [vmem:[#allocation10 + $0x1e8] sm:$0xff]
      %v1054 = vld [vmem:[#allocation10 + $0x1f0] sm:$0xff]
      %v1055 = vld [vmem:[#allocation10 + $0x1f8] sm:$0xff]
      %v1056 = vmul.f32 %v992, 0.01
      %v1057 = vmul.f32 %v993, 0.01
      %v1058 = vmul.f32 %v994, 0.01
      %v1059 = vmul.f32 %v995, 0.01
      %v1060 = vmul.f32 %v996, 0.01
      %v1061 = vmul.f32 %v997, 0.01
      %v1062 = vmul.f32 %v998, 0.01
      %v1063 = vmul.f32 %v999, 0.01
      %v1064 = vmul.f32 %v1000, 0.01
      %v1065 = vmul.f32 %v1001, 0.01
      %v1066 = vmul.f32 %v1002, 0.01
      %v1067 = vmul.f32 %v1003, 0.01
      %v1068 = vmul.f32 %v1004, 0.01
      %v1069 = vmul.f32 %v1005, 0.01
      %v1070 = vmul.f32 %v1006, 0.01
      %v1071 = vmul.f32 %v1007, 0.01
      %v1072 = vmul.f32 %v1008, 0.01
      %v1073 = vmul.f32 %v1009, 0.01
      %v1074 = vmul.f32 %v1010, 0.01
      %v1075 = vmul.f32 %v1011, 0.01
      %v1076 = vmul.f32 %v1012, 0.01
      %v1077 = vmul.f32 %v1013, 0.01
      %v1078 = vmul.f32 %v1014, 0.01
      %v1079 = vmul.f32 %v1015, 0.01
      %v1080 = vmul.f32 %v1016, 0.01
      %v1081 = vmul.f32 %v1017, 0.01
      %v1082 = vmul.f32 %v1018, 0.01
      %v1083 = vmul.f32 %v1019, 0.01
      %v1084 = vmul.f32 %v1020, 0.01
      %v1085 = vmul.f32 %v1021, 0.01
      %v1086 = vmul.f32 %v1022, 0.01
      %v1087 = vmul.f32 %v1023, 0.01
      %v1088 = vmul.f32 %v1024, 0.01
      %v1089 = vmul.f32 %v1025, 0.01
      %v1090 = vmul.f32 %v1026, 0.01
      %v1091 = vmul.f32 %v1027, 0.01
      %v1092 = vmul.f32 %v1028, 0.01
      %v1093 = vmul.f32 %v1029, 0.01
      %v1094 = vmul.f32 %v1030, 0.01
      %v1095 = vmul.f32 %v1031, 0.01
      %v1096 = vmul.f32 %v1032, 0.01
      %v1097 = vmul.f32 %v1033, 0.01
      %v1098 = vmul.f32 %v1034, 0.01
      %v1099 = vmul.f32 %v1035, 0.01
      %v1100 = vmul.f32 %v1036, 0.01
      %v1101 = vmul.f32 %v1037, 0.01
      %v1102 = vmul.f32 %v1038, 0.01
      %v1103 = vmul.f32 %v1039, 0.01
      %v1104 = vmul.f32 %v1040, 0.01
      %v1105 = vmul.f32 %v1041, 0.01
      %v1106 = vmul.f32 %v1042, 0.01
      %v1107 = vmul.f32 %v1043, 0.01
      %v1108 = vmul.f32 %v1044, 0.01
      %v1109 = vmul.f32 %v1045, 0.01
      %v1110 = vmul.f32 %v1046, 0.01
      %v1111 = vmul.f32 %v1047, 0.01
      %v1112 = vmul.f32 %v1048, 0.01
      %v1113 = vmul.f32 %v1049, 0.01
      %v1114 = vmul.f32 %v1050, 0.01
      %v1115 = vmul.f32 %v1051, 0.01
      %v1116 = vmul.f32 %v1052, 0.01
      %v1117 = vmul.f32 %v1053, 0.01
      %v1118 = vmul.f32 %v1054, 0.01
      %v1119 = vmul.f32 %v1055, 0.01
      %v1120 = vld [vmem:[#allocation11] sm:$0xff]
      %v1121 = vld [vmem:[#allocation11 + $0x8] sm:$0xff]
      %v1122 = vld [vmem:[#allocation11 + $0x10] sm:$0xff]
      %v1123 = vld [vmem:[#allocation11 + $0x18] sm:$0xff]
      %v1124 = vld [vmem:[#allocation11 + $0x20] sm:$0xff]
      %v1125 = vld [vmem:[#allocation11 + $0x28] sm:$0xff]
      %v1126 = vld [vmem:[#allocation11 + $0x30] sm:$0xff]
      %v1127 = vld [vmem:[#allocation11 + $0x38] sm:$0xff]
      %v1128 = vld [vmem:[#allocation11 + $0x40] sm:$0xff]
      %v1129 = vld [vmem:[#allocation11 + $0x48] sm:$0xff]
      %v1130 = vld [vmem:[#allocation11 + $0x50] sm:$0xff]
      %v1131 = vld [vmem:[#allocation11 + $0x58] sm:$0xff]
      %v1132 = vld [vmem:[#allocation11 + $0x60] sm:$0xff]
      %v1133 = vld [vmem:[#allocation11 + $0x68] sm:$0xff]
      %v1134 = vld [vmem:[#allocation11 + $0x70] sm:$0xff]
      %v1135 = vld [vmem:[#allocation11 + $0x78] sm:$0xff]
      %v1136 = vld [vmem:[#allocation11 + $0x80] sm:$0xff]
      %v1137 = vld [vmem:[#allocation11 + $0x88] sm:$0xff]
      %v1138 = vld [vmem:[#allocation11 + $0x90] sm:$0xff]
      %v1139 = vld [vmem:[#allocation11 + $0x98] sm:$0xff]
      %v1140 = vld [vmem:[#allocation11 + $0xa0] sm:$0xff]
      %v1141 = vld [vmem:[#allocation11 + $0xa8] sm:$0xff]
      %v1142 = vld [vmem:[#allocation11 + $0xb0] sm:$0xff]
      %v1143 = vld [vmem:[#allocation11 + $0xb8] sm:$0xff]
      %v1144 = vld [vmem:[#allocation11 + $0xc0] sm:$0xff]
      %v1145 = vld [vmem:[#allocation11 + $0xc8] sm:$0xff]
      %v1146 = vld [vmem:[#allocation11 + $0xd0] sm:$0xff]
      %v1147 = vld [vmem:[#allocation11 + $0xd8] sm:$0xff]
      %v1148 = vld [vmem:[#allocation11 + $0xe0] sm:$0xff]
      %v1149 = vld [vmem:[#allocation11 + $0xe8] sm:$0xff]
      %v1150 = vld [vmem:[#allocation11 + $0xf0] sm:$0xff]
      %v1151 = vld [vmem:[#allocation11 + $0xf8] sm:$0xff]
      %v1152 = vld [vmem:[#allocation11 + $0x100] sm:$0xff]
      %v1153 = vld [vmem:[#allocation11 + $0x108] sm:$0xff]
      %v1154 = vld [vmem:[#allocation11 + $0x110] sm:$0xff]
      %v1155 = vld [vmem:[#allocation11 + $0x118] sm:$0xff]
      %v1156 = vld [vmem:[#allocation11 + $0x120] sm:$0xff]
      %v1157 = vld [vmem:[#allocation11 + $0x128] sm:$0xff]
      %v1158 = vld [vmem:[#allocation11 + $0x130] sm:$0xff]
      %v1159 = vld [vmem:[#allocation11 + $0x138] sm:$0xff]
      %v1160 = vld [vmem:[#allocation11 + $0x140] sm:$0xff]
      %v1161 = vld [vmem:[#allocation11 + $0x148] sm:$0xff]
      %v1162 = vld [vmem:[#allocation11 + $0x150] sm:$0xff]
      %v1163 = vld [vmem:[#allocation11 + $0x158] sm:$0xff]
      %v1164 = vld [vmem:[#allocation11 + $0x160] sm:$0xff]
      %v1165 = vld [vmem:[#allocation11 + $0x168] sm:$0xff]
      %v1166 = vld [vmem:[#allocation11 + $0x170] sm:$0xff]
      %v1167 = vld [vmem:[#allocation11 + $0x178] sm:$0xff]
      %v1168 = vld [vmem:[#allocation11 + $0x180] sm:$0xff]
      %v1169 = vld [vmem:[#allocation11 + $0x188] sm:$0xff]
      %v1170 = vld [vmem:[#allocation11 + $0x190] sm:$0xff]
      %v1171 = vld [vmem:[#allocation11 + $0x198] sm:$0xff]
      %v1172 = vld [vmem:[#allocation11 + $0x1a0] sm:$0xff]
      %v1173 = vld [vmem:[#allocation11 + $0x1a8] sm:$0xff]
      %v1174 = vld [vmem:[#allocation11 + $0x1b0] sm:$0xff]
      %v1175 = vld [vmem:[#allocation11 + $0x1b8] sm:$0xff]
      %v1176 = vld [vmem:[#allocation11 + $0x1c0] sm:$0xff]
      %v1177 = vld [vmem:[#allocation11 + $0x1c8] sm:$0xff]
      %v1178 = vld [vmem:[#allocation11 + $0x1d0] sm:$0xff]
      %v1179 = vld [vmem:[#allocation11 + $0x1d8] sm:$0xff]
      %v1180 = vld [vmem:[#allocation11 + $0x1e0] sm:$0xff]
      %v1181 = vld [vmem:[#allocation11 + $0x1e8] sm:$0xff]
      %v1182 = vld [vmem:[#allocation11 + $0x1f0] sm:$0xff]
      %v1183 = vld [vmem:[#allocation11 + $0x1f8] sm:$0xff]
      %v1184 = vmul.f32 %v1120, 0.0038671875
      %v1185 = vmul.f32 %v1121, 0.0038671875
      %v1186 = vmul.f32 %v1122, 0.0038671875
      %v1187 = vmul.f32 %v1123, 0.0038671875
      %v1188 = vmul.f32 %v1124, 0.0038671875
      %v1189 = vmul.f32 %v1125, 0.0038671875
      %v1190 = vmul.f32 %v1126, 0.0038671875
      %v1191 = vmul.f32 %v1127, 0.0038671875
      %v1192 = vmul.f32 %v1128, 0.0038671875
      %v1193 = vmul.f32 %v1129, 0.0038671875
      %v1194 = vmul.f32 %v1130, 0.0038671875
      %v1195 = vmul.f32 %v1131, 0.0038671875
      %v1196 = vmul.f32 %v1132, 0.0038671875
      %v1197 = vmul.f32 %v1133, 0.0038671875
      %v1198 = vmul.f32 %v1134, 0.0038671875
      %v1199 = vmul.f32 %v1135, 0.0038671875
      %v1200 = vmul.f32 %v1136, 0.0038671875
      %v1201 = vmul.f32 %v1137, 0.0038671875
      %v1202 = vmul.f32 %v1138, 0.0038671875
      %v1203 = vmul.f32 %v1139, 0.0038671875
      %v1204 = vmul.f32 %v1140, 0.0038671875
      %v1205 = vmul.f32 %v1141, 0.0038671875
      %v1206 = vmul.f32 %v1142, 0.0038671875
      %v1207 = vmul.f32 %v1143, 0.0038671875
      %v1208 = vmul.f32 %v1144, 0.0038671875
      %v1209 = vmul.f32 %v1145, 0.0038671875
      %v1210 = vmul.f32 %v1146, 0.0038671875
      %v1211 = vmul.f32 %v1147, 0.0038671875
      %v1212 = vmul.f32 %v1148, 0.0038671875
      %v1213 = vmul.f32 %v1149, 0.0038671875
      %v1214 = vmul.f32 %v1150, 0.0038671875
      %v1215 = vmul.f32 %v1151, 0.0038671875
      %v1216 = vmul.f32 %v1152, 0.0038671875
      %v1217 = vmul.f32 %v1153, 0.0038671875
      %v1218 = vmul.f32 %v1154, 0.0038671875
      %v1219 = vmul.f32 %v1155, 0.0038671875
      %v1220 = vmul.f32 %v1156, 0.0038671875
      %v1221 = vmul.f32 %v1157, 0.0038671875
      %v1222 = vmul.f32 %v1158, 0.0038671875
      %v1223 = vmul.f32 %v1159, 0.0038671875
      %v1224 = vmul.f32 %v1160, 0.0038671875
      %v1225 = vmul.f32 %v1161, 0.0038671875
      %v1226 = vmul.f32 %v1162, 0.0038671875
      %v1227 = vmul.f32 %v1163, 0.0038671875
      %v1228 = vmul.f32 %v1164, 0.0038671875
      %v1229 = vmul.f32 %v1165, 0.0038671875
      %v1230 = vmul.f32 %v1166, 0.0038671875
      %v1231 = vmul.f32 %v1167, 0.0038671875
      %v1232 = vmul.f32 %v1168, 0.0038671875
      %v1233 = vmul.f32 %v1169, 0.0038671875
      %v1234 = vmul.f32 %v1170, 0.0038671875
      %v1235 = vmul.f32 %v1171, 0.0038671875
      %v1236 = vmul.f32 %v1172, 0.0038671875
      %v1237 = vmul.f32 %v1173, 0.0038671875
      %v1238 = vmul.f32 %v1174, 0.0038671875
      %v1239 = vmul.f32 %v1175, 0.0038671875
      %v1240 = vmul.f32 %v1176, 0.0038671875
      %v1241 = vmul.f32 %v1177, 0.0038671875
      %v1242 = vmul.f32 %v1178, 0.0038671875
      %v1243 = vmul.f32 %v1179, 0.0038671875
      %v1244 = vmul.f32 %v1180, 0.0038671875
      %v1245 = vmul.f32 %v1181, 0.0038671875
      %v1246 = vmul.f32 %v1182, 0.0038671875
      %v1247 = vmul.f32 %v1183, 0.0038671875
      %v1248 = vadd.f32 %v1056, %v1184
      %v1249 = vadd.f32 %v1057, %v1185
      %v1250 = vadd.f32 %v1058, %v1186
      %v1251 = vadd.f32 %v1059, %v1187
      %v1252 = vadd.f32 %v1060, %v1188
      %v1253 = vadd.f32 %v1061, %v1189
      %v1254 = vadd.f32 %v1062, %v1190
      %v1255 = vadd.f32 %v1063, %v1191
      %v1256 = vadd.f32 %v1064, %v1192
      %v1257 = vadd.f32 %v1065, %v1193
      %v1258 = vadd.f32 %v1066, %v1194
      %v1259 = vadd.f32 %v1067, %v1195
      %v1260 = vadd.f32 %v1068, %v1196
      %v1261 = vadd.f32 %v1069, %v1197
      %v1262 = vadd.f32 %v1070, %v1198
      %v1263 = vadd.f32 %v1071, %v1199
      %v1264 = vadd.f32 %v1072, %v1200
      %v1265 = vadd.f32 %v1073, %v1201
      %v1266 = vadd.f32 %v1074, %v1202
      %v1267 = vadd.f32 %v1075, %v1203
      %v1268 = vadd.f32 %v1076, %v1204
      %v1269 = vadd.f32 %v1077, %v1205
      %v1270 = vadd.f32 %v1078, %v1206
      %v1271 = vadd.f32 %v1079, %v1207
      %v1272 = vadd.f32 %v1080, %v1208
      %v1273 = vadd.f32 %v1081, %v1209
      %v1274 = vadd.f32 %v1082, %v1210
      %v1275 = vadd.f32 %v1083, %v1211
      %v1276 = vadd.f32 %v1084, %v1212
      %v1277 = vadd.f32 %v1085, %v1213
      %v1278 = vadd.f32 %v1086, %v1214
      %v1279 = vadd.f32 %v1087, %v1215
      %v1280 = vadd.f32 %v1088, %v1216
      %v1281 = vadd.f32 %v1089, %v1217
      %v1282 = vadd.f32 %v1090, %v1218
      %v1283 = vadd.f32 %v1091, %v1219
      %v1284 = vadd.f32 %v1092, %v1220
      %v1285 = vadd.f32 %v1093, %v1221
      %v1286 = vadd.f32 %v1094, %v1222
      %v1287 = vadd.f32 %v1095, %v1223
      %v1288 = vadd.f32 %v1096, %v1224
      %v1289 = vadd.f32 %v1097, %v1225
      %v1290 = vadd.f32 %v1098, %v1226
      %v1291 = vadd.f32 %v1099, %v1227
      %v1292 = vadd.f32 %v1100, %v1228
      %v1293 = vadd.f32 %v1101, %v1229
      %v1294 = vadd.f32 %v1102, %v1230
      %v1295 = vadd.f32 %v1103, %v1231
      %v1296 = vadd.f32 %v1104, %v1232
      %v1297 = vadd.f32 %v1105, %v1233
      %v1298 = vadd.f32 %v1106, %v1234
      %v1299 = vadd.f32 %v1107, %v1235
      %v1300 = vadd.f32 %v1108, %v1236
      %v1301 = vadd.f32 %v1109, %v1237
      %v1302 = vadd.f32 %v1110, %v1238
      %v1303 = vadd.f32 %v1111, %v1239
      %v1304 = vadd.f32 %v1112, %v1240
      %v1305 = vadd.f32 %v1113, %v1241
      %v1306 = vadd.f32 %v1114, %v1242
      %v1307 = vadd.f32 %v1115, %v1243
      %v1308 = vadd.f32 %v1116, %v1244
      %v1309 = vadd.f32 %v1117, %v1245
      %v1310 = vadd.f32 %v1118, %v1246
      %v1311 = vadd.f32 %v1119, %v1247
      %1312 = vst [vmem:[#allocation11] sm:$0xff] %v1248
      %1313 = vst [vmem:[#allocation11 + $0x8] sm:$0xff] %v1249
      %1314 = vst [vmem:[#allocation11 + $0x10] sm:$0xff] %v1250
      %1315 = vst [vmem:[#allocation11 + $0x18] sm:$0xff] %v1251
      %1316 = vst [vmem:[#allocation11 + $0x20] sm:$0xff] %v1252
      %1317 = vst [vmem:[#allocation11 + $0x28] sm:$0xff] %v1253
      %1318 = vst [vmem:[#allocation11 + $0x30] sm:$0xff] %v1254
      %1319 = vst [vmem:[#allocation11 + $0x38] sm:$0xff] %v1255
      %1320 = vst [vmem:[#allocation11 + $0x40] sm:$0xff] %v1256
      %1321 = vst [vmem:[#allocation11 + $0x48] sm:$0xff] %v1257
      %1322 = vst [vmem:[#allocation11 + $0x50] sm:$0xff] %v1258
      %1323 = vst [vmem:[#allocation11 + $0x58] sm:$0xff] %v1259
      %1324 = vst [vmem:[#allocation11 + $0x60] sm:$0xff] %v1260
      %1325 = vst [vmem:[#allocation11 + $0x68] sm:$0xff] %v1261
      %1326 = vst [vmem:[#allocation11 + $0x70] sm:$0xff] %v1262
      %1327 = vst [vmem:[#allocation11 + $0x78] sm:$0xff] %v1263
      %1328 = vst [vmem:[#allocation11 + $0x80] sm:$0xff] %v1264
      %1329 = vst [vmem:[#allocation11 + $0x88] sm:$0xff] %v1265
      %1330 = vst [vmem:[#allocation11 + $0x90] sm:$0xff] %v1266
      %1331 = vst [vmem:[#allocation11 + $0x98] sm:$0xff] %v1267
      %1332 = vst [vmem:[#allocation11 + $0xa0] sm:$0xff] %v1268
      %1333 = vst [vmem:[#allocation11 + $0xa8] sm:$0xff] %v1269
      %1334 = vst [vmem:[#allocation11 + $0xb0] sm:$0xff] %v1270
      %1335 = vst [vmem:[#allocation11 + $0xb8] sm:$0xff] %v1271
      %1336 = vst [vmem:[#allocation11 + $0xc0] sm:$0xff] %v1272
      %1337 = vst [vmem:[#allocation11 + $0xc8] sm:$0xff] %v1273
      %1338 = vst [vmem:[#allocation11 + $0xd0] sm:$0xff] %v1274
      %1339 = vst [vmem:[#allocation11 + $0xd8] sm:$0xff] %v1275
      %1340 = vst [vmem:[#allocation11 + $0xe0] sm:$0xff] %v1276
      %1341 = vst [vmem:[#allocation11 + $0xe8] sm:$0xff] %v1277
      %1342 = vst [vmem:[#allocation11 + $0xf0] sm:$0xff] %v1278
      %1343 = vst [vmem:[#allocation11 + $0xf8] sm:$0xff] %v1279
      %1344 = vst [vmem:[#allocation11 + $0x100] sm:$0xff] %v1280
      %1345 = vst [vmem:[#allocation11 + $0x108] sm:$0xff] %v1281
      %1346 = vst [vmem:[#allocation11 + $0x110] sm:$0xff] %v1282
      %1347 = vst [vmem:[#allocation11 + $0x118] sm:$0xff] %v1283
      %1348 = vst [vmem:[#allocation11 + $0x120] sm:$0xff] %v1284
      %1349 = vst [vmem:[#allocation11 + $0x128] sm:$0xff] %v1285
      %1350 = vst [vmem:[#allocation11 + $0x130] sm:$0xff] %v1286
      %1351 = vst [vmem:[#allocation11 + $0x138] sm:$0xff] %v1287
      %1352 = vst [vmem:[#allocation11 + $0x140] sm:$0xff] %v1288
      %1353 = vst [vmem:[#allocation11 + $0x148] sm:$0xff] %v1289
      %1354 = vst [vmem:[#allocation11 + $0x150] sm:$0xff] %v1290
      %1355 = vst [vmem:[#allocation11 + $0x158] sm:$0xff] %v1291
      %1356 = vst [vmem:[#allocation11 + $0x160] sm:$0xff] %v1292
      %1357 = vst [vmem:[#allocation11 + $0x168] sm:$0xff] %v1293
      %1358 = vst [vmem:[#allocation11 + $0x170] sm:$0xff] %v1294
      %1359 = vst [vmem:[#allocation11 + $0x178] sm:$0xff] %v1295
      %1360 = vst [vmem:[#allocation11 + $0x180] sm:$0xff] %v1296
      %1361 = vst [vmem:[#allocation11 + $0x188] sm:$0xff] %v1297
      %1362 = vst [vmem:[#allocation11 + $0x190] sm:$0xff] %v1298
      %1363 = vst [vmem:[#allocation11 + $0x198] sm:$0xff] %v1299
      %1364 = vst [vmem:[#allocation11 + $0x1a0] sm:$0xff] %v1300
      %1365 = vst [vmem:[#allocation11 + $0x1a8] sm:$0xff] %v1301
      %1366 = vst [vmem:[#allocation11 + $0x1b0] sm:$0xff] %v1302
      %1367 = vst [vmem:[#allocation11 + $0x1b8] sm:$0xff] %v1303
      %1368 = vst [vmem:[#allocation11 + $0x1c0] sm:$0xff] %v1304
      %1369 = vst [vmem:[#allocation11 + $0x1c8] sm:$0xff] %v1305
      %1370 = vst [vmem:[#allocation11 + $0x1d0] sm:$0xff] %v1306
      %1371 = vst [vmem:[#allocation11 + $0x1d8] sm:$0xff] %v1307
      %1372 = vst [vmem:[#allocation11 + $0x1e0] sm:$0xff] %v1308
      %1373 = vst [vmem:[#allocation11 + $0x1e8] sm:$0xff] %v1309
      %1374 = vst [vmem:[#allocation11 + $0x1f0] sm:$0xff] %v1310
      %1375 = vst [vmem:[#allocation11 + $0x1f8] sm:$0xff] %v1311
    $region33: #{tpu_custom_call.1} parent=1 // pred_fallthru
      _
    // Predicated region
    $region34: #{tpu_custom_call.1} parent=1 // pred_check
      _
    $region35: #{tpu_custom_call.1} parent=1 // pred_check_branch
      %1377 = sbr.rel (0) target = $region37
    $region36: #{tpu_custom_call.1} parent=1 // pred_region
      %s1378 = sld [smem:[#allocation3]]
      %s1379 = sld [smem:[#allocation4]]
      %s1380 = smul.u32 32, %s1378
      %s1381 = smul.u32 2, %s1379
      %s1383 = ssub.s32 8192, 8192
      %1384 = vsyncadd [#allocation7], %s1383
      %s1385 = smul.addr %s1380, 2
      %s1386 = sadd.s32 %s1381, %s1385
      %s1387 = smul.addr %s1386, 128
      %s1388 = scalar_lea.hbm %s5, %s1387
      %s1389 = sshll.u32 [#allocation11], 4
      %s1390 = int_to_ptr.vmem [resolvable:$true] %s1389
      %1395 = dma.vmem_to_hbm [thread:$0]  %s1390, 8192, %s1388, [#allocation7], 256, 256, 16
    $region37: #{tpu_custom_call.1} parent=1 // pred_fallthru
      _
    // Predicated region
    $region38: #{tpu_custom_call.1} parent=1 // pred_check
      _
    $region39: #{tpu_custom_call.1} parent=1 // pred_check_branch
      %1397 = sbr.rel (0) target = $region41
    $region40: #{tpu_custom_call.1} parent=1 // pred_region
      %1398 = dma.done [#allocation7], 8192
    $region41: #{tpu_custom_call.1} parent=1 // pred_fallthru
      _
    %1399 = vsyncpa [#allocation6], 1
    %1400 = vsyncpa [#allocation9], 1
    %1401 = vsyncpa [#allocation7], 1

</llo_original>
